<compile_context>
chip_gen: v5e
topology: v5e:2x2
jax: 0.10.0
libtpu: 0.0.40
codegen_flags: <defaults>
</compile_context>

<pallas_src>
import jax
import jax.numpy as jnp
from jax import lax
from jax.experimental import pallas as pl
from jax.experimental.pallas import tpu as pltpu

# ----- module hyper-parameters (consistent with ResidualCouplingLayer.__init__) -----
CHANNELS = 4              # channels (must be even)
HALF = CHANNELS // 2      # half_channels
HID = 32                  # hidden_channels
KSIZE = 5                 # kernel_size (odd)
DIL_RATE = 2              # dilation_rate
N_LAYERS = 3              # n_layers
B = 2                     # batch
T = 16                    # time steps
# p_dropout = 0 (dropout == identity), gin_channels = 0 (no conditioning), mean_only=False
# TODO(synk): only the reverse=False (forward) branch of the module is implemented.

MAX_PAD = (KSIZE // 2) * (DIL_RATE ** (N_LAYERS - 1))   # largest 'same' padding reach (= 8)
SEG = T + MAX_PAD                                       # lane stride between batch segments
PW_RAW = B * T + (B + 1) * MAX_PAD                      # gap-packed width actually used (56)
PW = ((PW_RAW + 127) // 128) * 128                      # pad to one full lane tile (128)
assert PW >= PW_RAW

# ----- packed-weight layout: one (W_ROWS, K*HID+1) f32 array ------------------------
# weights occupy columns [0, K_in), the bias lives in the last column; every section
# starts on an 8-row (sublane) boundary so all in-kernel loads are sublane-aligned.
W_COLS = KSIZE * HID + 1                                # 161
BIAS_COL = KSIZE * HID                                  # 160
OFF_PRE = 0                                             # (HID, HALF)   + bias
OFF_IN = [HID + i * 4 * HID for i in range(N_LAYERS)]   # (2*HID, K*HID)+ bias
OFF_RS = [HID + i * 4 * HID + 2 * HID for i in range(N_LAYERS)]   # (2*HID|HID, HID)+bias
OFF_POST = HID + N_LAYERS * 4 * HID                     # (CHANNELS, HID)+ bias
W_ROWS = OFF_POST + 8                                   # 424


# ------------------------------------------------------------------------------------
# Pallas kernel: whole batch, whole coupling layer, one invocation (no grid).
# Orientation: channels on sublanes, time on lanes (native torch NCW, zero transposes).
# ------------------------------------------------------------------------------------
def coupling_kernel(x_ref, mask_ref, w_ref, xout_ref, logdet_ref):
    f32 = jnp.float32

    # --- gap-packed activations: [gap | batch0 | gap | batch1 | gap | tail-zeros] -----
    gap_x = jnp.zeros((CHANNELS, MAX_PAD), f32)
    gap_m = jnp.zeros((1, MAX_PAD), f32)
    x_parts, m_parts = [gap_x], [gap_m]
    for b in range(B):
        x_parts += [x_ref[b], gap_x]          # (CHANNELS, T) per batch, NCW as stored
        m_parts += [mask_ref[b], gap_m]       # (1, T) per batch
    tail = PW - PW_RAW
    if tail:
        x_parts.append(jnp.zeros((CHANNELS, tail), f32))
        m_parts.append(jnp.zeros((1, tail), f32))
    x_p = jnp.concatenate(x_parts, axis=1)    # (CHANNELS, PW)
    mask_p = jnp.concatenate(m_parts, axis=1)  # (1, PW) — zero in gaps & tail

    x0 = x_p[:HALF, :]                        # (HALF, PW)
    x1 = x_p[HALF:, :]                        # (HALF, PW)
    mask_h = jnp.broadcast_to(mask_p, (HID, PW))   # hoisted once, reused every layer

    # --- pre: 1x1 conv on x0, masked ---------------------------------------------------
    pre_w = w_ref[OFF_PRE:OFF_PRE + HID, 0:HALF]                       # (HID, HALF)
    pre_b = w_ref[OFF_PRE:OFF_PRE + HID, BIAS_COL:BIAS_COL + 1]        # (HID, 1)
    h = (jnp.dot(pre_w, x0, preferred_element_type=f32) + pre_b) * mask_h   # (HID, PW)

    # --- WN encoder ---------------------------------------------------------------------
    output = jnp.zeros((HID, PW), f32)
    for i in range(N_LAYERS):                                          # static unrolled
        d = DIL_RATE ** i
        # dilated taps = lane rotations of h; gaps (zeroed every layer by mask_h) provide
        # the 'same' zero padding and isolate batch elements, wrapped lanes only ever
        # land in masked gap columns.
        taps = []
        for k in range(KSIZE):
            off = (k - KSIZE // 2) * d
            s = off % PW
            if s == 0:
                taps.append(h)
            else:                              # manual roll: result[:, c] = h[:, (c+off)%PW]
                taps.append(jnp.concatenate([h[:, s:], h[:, :s]], axis=1))
        xcol = jnp.concatenate(taps, axis=0)                           # (K*HID, PW)

        w_in = w_ref[OFF_IN[i]:OFF_IN[i] + 2 * HID, 0:KSIZE * HID]     # (2*HID, K*HID)
        b_in = w_ref[OFF_IN[i]:OFF_IN[i] + 2 * HID, BIAS_COL:BIAS_COL + 1]
        x_in = jnp.dot(w_in, xcol, preferred_element_type=f32) + b_in  # (2*HID, PW)
        # fused_add_tanh_sigmoid_multiply with g = 0
        acts = jnp.tanh(x_in[:HID, :]) * jax.nn.sigmoid(x_in[HID:, :])  # (HID, PW)

        if i < N_LAYERS - 1:
            w_rs = w_ref[OFF_RS[i]:OFF_RS[i] + 2 * HID, 0:HID]         # (2*HID, HID)
            b_rs = w_ref[OFF_RS[i]:OFF_RS[i] + 2 * HID, BIAS_COL:BIAS_COL + 1]
            rs = jnp.dot(w_rs, acts, preferred_element_type=f32) + b_rs
            h = (h + rs[:HID, :]) * mask_h
            output = output + rs[HID:, :]
        else:
            # last layer has only HID outputs — true half-width weight, no dead half
            w_rs = w_ref[OFF_RS[i]:OFF_RS[i] + HID, 0:HID]             # (HID, HID)
            b_rs = w_ref[OFF_RS[i]:OFF_RS[i] + HID, BIAS_COL:BIAS_COL + 1]
            output = output + jnp.dot(w_rs, acts, preferred_element_type=f32) + b_rs
    output = output * mask_h

    # --- post: 1x1 conv (zero-initialized in the module), masked; affine coupling -------
    w_post = w_ref[OFF_POST:OFF_POST + CHANNELS, 0:HID]                # (CHANNELS, HID)
    b_post = w_ref[OFF_POST:OFF_POST + CHANNELS, BIAS_COL:BIAS_COL + 1]
    stats = (jnp.dot(w_post, output, preferred_element_type=f32)
             + b_post) * mask_h[:CHANNELS, :]                          # (CHANNELS, PW)
    m = stats[:HALF, :]
    logs = stats[HALF:, :]
    x1_new = m + x1 * jnp.exp(logs) * mask_h[:HALF, :]                 # (HALF, PW)

    # --- write NCW output and per-batch logdet (all glue in-kernel) ----------------------
    ld_rows = []
    for b in range(B):
        c0 = MAX_PAD + b * SEG
        xout_ref[b] = jnp.concatenate([x0[:, c0:c0 + T], x1_new[:, c0:c0 + T]], axis=0)
        ld = jnp.sum(logs[:, c0:c0 + T], axis=1, keepdims=True)        # (HALF, 1)
        ld_rows.append(jnp.sum(ld, axis=0, keepdims=True))             # (1, 1)
    logdet_ref[...] = jnp.concatenate(ld_rows, axis=0)                 # (B, 1)


# ------------------------------------------------------------------------------------
# Wrapper: torch NCW in / NCW out; only a trivial (B,1)->(B,) squeeze outside the kernel.
# ------------------------------------------------------------------------------------
def residual_coupling_forward(x, x_mask, w_packed):
    # x: (B, CHANNELS, T), x_mask: (B, 1, T)  — PyTorch NCW layout, consumed directly.
    x_out, logdet = pl.pallas_call(
        coupling_kernel,
        out_shape=(jax.ShapeDtypeStruct((B, CHANNELS, T), jnp.float32),
                   jax.ShapeDtypeStruct((B, 1), jnp.float32)),
        in_specs=[pl.BlockSpec(memory_space=pltpu.MemorySpace.VMEM)] * 3,
        out_specs=(pl.BlockSpec(memory_space=pltpu.MemorySpace.VMEM),
                   pl.BlockSpec(memory_space=pltpu.MemorySpace.VMEM)),
    )(x.astype(jnp.float32), x_mask.astype(jnp.float32), w_packed)
    return x_out, logdet[:, 0]


# ------------------------------------------------------------------------------------
# Parameter construction (deterministic, torch layouts per module __init__)
# ------------------------------------------------------------------------------------
def init_torch_params(key):
    ks = jax.random.split(key, 2 + 4 * N_LAYERS)
    p = {
        # pre: Conv1d(HALF, HID, 1)
        "pre_w": jax.random.normal(ks[0], (HID, HALF, 1), jnp.float32) * 0.3,
        "pre_b": jax.random.normal(ks[1], (HID,), jnp.float32) * 0.1,
        "in_w": [], "in_b": [], "rs_w": [], "rs_b": [],
        # post: Conv1d(HID, 2*HALF, 1) — zero-initialized weight AND bias per __init__
        "post_w": jnp.zeros((2 * HALF, HID, 1), jnp.float32),
        "post_b": jnp.zeros((2 * HALF,), jnp.float32),
    }
    for i in range(N_LAYERS):
        rs_out = 2 * HID if i < N_LAYERS - 1 else HID
        # weight_norm at init == plain conv forward, so plain weights are faithful
        p["in_w"].append(jax.random.normal(
            ks[2 + 4 * i], (2 * HID, HID, KSIZE), jnp.float32) * (HID * KSIZE) ** -0.5)
        p["in_b"].append(jax.random.normal(
            ks[3 + 4 * i], (2 * HID,), jnp.float32) * 0.05)
        p["rs_w"].append(jax.random.normal(
            ks[4 + 4 * i], (rs_out, HID, 1), jnp.float32) * HID ** -0.5)
        p["rs_b"].append(jax.random.normal(
            ks[5 + 4 * i], (rs_out,), jnp.float32) * 0.05)
    return p


def to_kernel_params(tp):
    """Pack every weight/bias into one lane-dense (W_ROWS, W_COLS) f32 array."""
    packed = jnp.zeros((W_ROWS, W_COLS), jnp.float32)

    def put(pk, row, wmat, bvec):
        r, c = wmat.shape
        pk = pk.at[row:row + r, 0:c].set(wmat.astype(jnp.float32))
        pk = pk.at[row:row + r, BIAS_COL].set(bvec.astype(jnp.float32))
        return pk

    packed = put(packed, OFF_PRE, tp["pre_w"][:, :, 0], tp["pre_b"])
    for i in range(N_LAYERS):
        # torch Conv1d weight (Cout, Cin, K) -> (Cout, K*Cin); column order (k, c_in)
        # matches the row order of the in-kernel im2col operand (tap k, channel c_in).
        w = jnp.transpose(tp["in_w"][i], (0, 2, 1)).reshape(2 * HID, KSIZE * HID)
        packed = put(packed, OFF_IN[i], w, tp["in_b"][i])
        packed = put(packed, OFF_RS[i], tp["rs_w"][i][:, :, 0], tp["rs_b"][i])
    packed = put(packed, OFF_POST, tp["post_w"][:, :, 0], tp["post_b"])
    return packed


# ------------------------------------------------------------------------------------
# Pure-JAX reference (independent check using lax.conv_general_dilated, NCW like torch)
# ------------------------------------------------------------------------------------
def _conv1d(x, w, b, dilation=1, padding=0):
    out = lax.conv_general_dilated(
        x, w, window_strides=(1,), padding=[(padding, padding)],
        rhs_dilation=(dilation,), dimension_numbers=("NCH", "OIH", "NCH"))
    return out + b[None, :, None]


def ref_forward(x, x_mask, tp):
    x0, x1 = x[:, :HALF], x[:, HALF:]
    h = _conv1d(x0, tp["pre_w"], tp["pre_b"]) * x_mask
    output = jnp.zeros_like(h)
    for i in range(N_LAYERS):
        d = DIL_RATE ** i
        pad = (KSIZE * d - d) // 2
        x_in = _conv1d(h, tp["in_w"][i], tp["in_b"][i], dilation=d, padding=pad)
        acts = jnp.tanh(x_in[:, :HID]) * jax.nn.sigmoid(x_in[:, HID:])
        rs = _conv1d(acts, tp["rs_w"][i], tp["rs_b"][i])
        if i < N_LAYERS - 1:
            h = (h + rs[:, :HID]) * x_mask
            output = output + rs[:, HID:]
        else:
            output = output + rs
    output = output * x_mask
    stats = _conv1d(output, tp["post_w"], tp["post_b"]) * x_mask
    m, logs = stats[:, :HALF], stats[:, HALF:]
    x1n = m + x1 * jnp.exp(logs) * x_mask
    return jnp.concatenate([x0, x1n], axis=1), jnp.sum(logs, axis=(1, 2))


if __name__ == "__main__":
    key = jax.random.PRNGKey(0)
    kparams, kx = jax.random.split(key, 2)
    tp = init_torch_params(kparams)

    x = jax.random.normal(kx, (B, CHANNELS, T), jnp.float32)
    lengths = jnp.array([T, T - 4], jnp.int32)
    x_mask = (jnp.arange(T)[None, :] < lengths[:, None]).astype(jnp.float32)[:, None, :]

    # Faithful forward (post conv zero-initialized per __init__ -> identity coupling, logdet=0).
    x_out, logdet = residual_coupling_forward(x, x_mask, to_kernel_params(tp))
    x_out = jax.block_until_ready(x_out)
    assert x_out.shape == (B, CHANNELS, T) and logdet.shape == (B,)
    ref_x, ref_ld = ref_forward(x, x_mask, tp)
    assert jnp.allclose(x_out, ref_x, atol=1e-5, rtol=1e-5), \
        f"max err {jnp.max(jnp.abs(x_out - ref_x))}"
    assert jnp.allclose(logdet, ref_ld, atol=1e-5, rtol=1e-5)

    # Extra numerical validation of the full affine-coupling path with a non-zero `post` conv.
    tp2 = dict(tp)
    e1, e2 = jax.random.split(jax.random.PRNGKey(1))
    tp2["post_w"] = jax.random.normal(e1, (2 * HALF, HID, 1), jnp.float32) * 0.1
    tp2["post_b"] = jax.random.normal(e2, (2 * HALF,), jnp.float32) * 0.1
    x_out2, logdet2 = residual_coupling_forward(x, x_mask, to_kernel_params(tp2))
    x_out2 = jax.block_until_ready(x_out2)
    ref_x2, ref_ld2 = ref_forward(x, x_mask, tp2)
    assert jnp.allclose(x_out2, ref_x2, atol=1e-4, rtol=1e-4), \
        f"max err {jnp.max(jnp.abs(x_out2 - ref_x2))}"
    assert jnp.allclose(logdet2, ref_ld2, atol=1e-4, rtol=1e-4)

    print("KERNEL_OK")
</pallas_src>

<mosaic_0001>
module attributes {stable_mosaic.version = 11 : i64} {
  func.func @coupling_kernel(%arg0: memref<2x4x16xf32, #tpu.memory_space<vmem>>, %arg1: memref<2x1x16xf32, #tpu.memory_space<vmem>>, %arg2: memref<424x161xf32, #tpu.memory_space<vmem>>, %arg3: memref<2x4x16xf32, #tpu.memory_space<vmem>>, %arg4: memref<2x1xf32, #tpu.memory_space<vmem>>) attributes {dimension_semantics = [], scalar_prefetch = 0 : i64, scratch_operands = 0 : i64, tpu.core_type = #tpu.core_type<tc>} {
    %cst = arith.constant 0.000000e+00 : f32
    %0 = vector.broadcast %cst : f32 to vector<4x8xf32>
    %cst_0 = arith.constant 0.000000e+00 : f32
    %1 = vector.broadcast %cst_0 : f32 to vector<1x8xf32>
    %c0 = arith.constant 0 : index
    %c0_1 = arith.constant 0 : index
    %c0_2 = arith.constant 0 : index
    %2 = vector.load %arg0[%c0, %c0_1, %c0_2] : memref<2x4x16xf32, #tpu.memory_space<vmem>>, vector<1x4x16xf32>
    %3 = vector.shape_cast %2 : vector<1x4x16xf32> to vector<4x16xf32>
    %c0_3 = arith.constant 0 : index
    %c0_4 = arith.constant 0 : index
    %c0_5 = arith.constant 0 : index
    %4 = vector.load %arg1[%c0_3, %c0_4, %c0_5] : memref<2x1x16xf32, #tpu.memory_space<vmem>>, vector<1x1x16xf32>
    %5 = vector.shape_cast %4 : vector<1x1x16xf32> to vector<1x16xf32>
    %c1 = arith.constant 1 : index
    %c0_6 = arith.constant 0 : index
    %c0_7 = arith.constant 0 : index
    %6 = vector.load %arg0[%c1, %c0_6, %c0_7] : memref<2x4x16xf32, #tpu.memory_space<vmem>>, vector<1x4x16xf32>
    %7 = vector.shape_cast %6 : vector<1x4x16xf32> to vector<4x16xf32>
    %c1_8 = arith.constant 1 : index
    %c0_9 = arith.constant 0 : index
    %c0_10 = arith.constant 0 : index
    %8 = vector.load %arg1[%c1_8, %c0_9, %c0_10] : memref<2x1x16xf32, #tpu.memory_space<vmem>>, vector<1x1x16xf32>
    %9 = vector.shape_cast %8 : vector<1x1x16xf32> to vector<1x16xf32>
    %cst_11 = arith.constant 0.000000e+00 : f32
    %10 = vector.broadcast %cst_11 : f32 to vector<4x72xf32>
    %cst_12 = arith.constant 0.000000e+00 : f32
    %11 = vector.broadcast %cst_12 : f32 to vector<1x72xf32>
    %12 = tpu.concatenate %0, %3, %0, %7, %0, %10 in 1 : vector<4x8xf32>, vector<4x16xf32>, vector<4x8xf32>, vector<4x16xf32>, vector<4x8xf32>, vector<4x72xf32> -> vector<4x128xf32>
    %13 = tpu.concatenate %1, %5, %1, %9, %1, %11 in 1 : vector<1x8xf32>, vector<1x16xf32>, vector<1x8xf32>, vector<1x16xf32>, vector<1x8xf32>, vector<1x72xf32> -> vector<1x128xf32>
    %14 = vector.extract_strided_slice %12 {offsets = [0, 0], sizes = [2, 128], strides = [1, 1]} : vector<4x128xf32> to vector<2x128xf32>
    %15 = vector.extract_strided_slice %12 {offsets = [2, 0], sizes = [2, 128], strides = [1, 1]} : vector<4x128xf32> to vector<2x128xf32>
    %16 = vector.shape_cast %13 : vector<1x128xf32> to vector<1x128xf32>
    %17 = vector.broadcast %16 : vector<1x128xf32> to vector<32x128xf32>
    %c0_13 = arith.constant 0 : index
    %c0_14 = arith.constant 0 : index
    %18 = vector.load %arg2[%c0_13, %c0_14] : memref<424x161xf32, #tpu.memory_space<vmem>>, vector<32x2xf32>
    %c0_15 = arith.constant 0 : index
    %c160 = arith.constant 160 : index
    %19 = vector.load %arg2[%c0_15, %c160] : memref<424x161xf32, #tpu.memory_space<vmem>>, vector<32x1xf32>
    %cst_16 = arith.constant dense<0.000000e+00> : vector<32x128xf32>
    %20 = tpu.matmul %18, %14, %cst_16 {dimension_numbers = #tpu.dot_dimension_numbers<[1], [0], [0], [1], [0, 0, 1, 1], [], []>} : vector<32x2xf32>, vector<2x128xf32>, vector<32x128xf32> -> vector<32x128xf32>
    %21 = vector.broadcast %19 : vector<32x1xf32> to vector<32x128xf32>
    %22 = arith.addf %20, %21 : vector<32x128xf32>
    %23 = arith.mulf %22, %17 : vector<32x128xf32>
    %cst_17 = arith.constant 0.000000e+00 : f32
    %24 = vector.broadcast %cst_17 : f32 to vector<32x128xf32>
    %25 = vector.extract_strided_slice %23 {offsets = [0, 126], sizes = [32, 2], strides = [1, 1]} : vector<32x128xf32> to vector<32x2xf32>
    %26 = vector.extract_strided_slice %23 {offsets = [0, 0], sizes = [32, 126], strides = [1, 1]} : vector<32x128xf32> to vector<32x126xf32>
    %27 = tpu.concatenate %25, %26 in 1 : vector<32x2xf32>, vector<32x126xf32> -> vector<32x128xf32>
    %28 = vector.extract_strided_slice %23 {offsets = [0, 127], sizes = [32, 1], strides = [1, 1]} : vector<32x128xf32> to vector<32x1xf32>
    %29 = vector.extract_strided_slice %23 {offsets = [0, 0], sizes = [32, 127], strides = [1, 1]} : vector<32x128xf32> to vector<32x127xf32>
    %30 = tpu.concatenate %28, %29 in 1 : vector<32x1xf32>, vector<32x127xf32> -> vector<32x128xf32>
    %31 = vector.extract_strided_slice %23 {offsets = [0, 1], sizes = [32, 127], strides = [1, 1]} : vector<32x128xf32> to vector<32x127xf32>
    %32 = vector.extract_strided_slice %23 {offsets = [0, 0], sizes = [32, 1], strides = [1, 1]} : vector<32x128xf32> to vector<32x1xf32>
    %33 = tpu.concatenate %31, %32 in 1 : vector<32x127xf32>, vector<32x1xf32> -> vector<32x128xf32>
    %34 = vector.extract_strided_slice %23 {offsets = [0, 2], sizes = [32, 126], strides = [1, 1]} : vector<32x128xf32> to vector<32x126xf32>
    %35 = vector.extract_strided_slice %23 {offsets = [0, 0], sizes = [32, 2], strides = [1, 1]} : vector<32x128xf32> to vector<32x2xf32>
    %36 = tpu.concatenate %34, %35 in 1 : vector<32x126xf32>, vector<32x2xf32> -> vector<32x128xf32>
    %37 = tpu.concatenate %27, %30, %23, %33, %36 in 0 : vector<32x128xf32>, vector<32x128xf32>, vector<32x128xf32>, vector<32x128xf32>, vector<32x128xf32> -> vector<160x128xf32>
    %c32 = arith.constant 32 : index
    %c0_18 = arith.constant 0 : index
    %38 = vector.load %arg2[%c32, %c0_18] : memref<424x161xf32, #tpu.memory_space<vmem>>, vector<64x160xf32>
    %c32_19 = arith.constant 32 : index
    %c160_20 = arith.constant 160 : index
    %39 = vector.load %arg2[%c32_19, %c160_20] : memref<424x161xf32, #tpu.memory_space<vmem>>, vector<64x1xf32>
    %cst_21 = arith.constant dense<0.000000e+00> : vector<64x128xf32>
    %40 = tpu.matmul %38, %37, %cst_21 {dimension_numbers = #tpu.dot_dimension_numbers<[1], [0], [0], [1], [0, 0, 1, 1], [], []>} : vector<64x160xf32>, vector<160x128xf32>, vector<64x128xf32> -> vector<64x128xf32>
    %41 = vector.broadcast %39 : vector<64x1xf32> to vector<64x128xf32>
    %42 = arith.addf %40, %41 : vector<64x128xf32>
    %43 = vector.extract_strided_slice %42 {offsets = [0, 0], sizes = [32, 128], strides = [1, 1]} : vector<64x128xf32> to vector<32x128xf32>
    %44 = math.tanh %43 : vector<32x128xf32>
    %45 = vector.extract_strided_slice %42 {offsets = [32, 0], sizes = [32, 128], strides = [1, 1]} : vector<64x128xf32> to vector<32x128xf32>
    %46 = arith.negf %45 : vector<32x128xf32>
    %47 = math.exp %46 : vector<32x128xf32>
    %cst_22 = arith.constant 1.000000e+00 : f32
    %48 = vector.broadcast %cst_22 : f32 to vector<32x128xf32>
    %49 = arith.addf %48, %47 : vector<32x128xf32>
    %50 = arith.divf %48, %49 : vector<32x128xf32>
    %51 = arith.mulf %44, %50 : vector<32x128xf32>
    %c96 = arith.constant 96 : index
    %c0_23 = arith.constant 0 : index
    %52 = vector.load %arg2[%c96, %c0_23] : memref<424x161xf32, #tpu.memory_space<vmem>>, vector<64x32xf32>
    %c96_24 = arith.constant 96 : index
    %c160_25 = arith.constant 160 : index
    %53 = vector.load %arg2[%c96_24, %c160_25] : memref<424x161xf32, #tpu.memory_space<vmem>>, vector<64x1xf32>
    %cst_26 = arith.constant dense<0.000000e+00> : vector<64x128xf32>
    %54 = tpu.matmul %52, %51, %cst_26 {dimension_numbers = #tpu.dot_dimension_numbers<[1], [0], [0], [1], [0, 0, 1, 1], [], []>} : vector<64x32xf32>, vector<32x128xf32>, vector<64x128xf32> -> vector<64x128xf32>
    %55 = vector.broadcast %53 : vector<64x1xf32> to vector<64x128xf32>
    %56 = arith.addf %54, %55 : vector<64x128xf32>
    %57 = vector.extract_strided_slice %56 {offsets = [0, 0], sizes = [32, 128], strides = [1, 1]} : vector<64x128xf32> to vector<32x128xf32>
    %58 = arith.addf %23, %57 : vector<32x128xf32>
    %59 = arith.mulf %58, %17 : vector<32x128xf32>
    %60 = vector.extract_strided_slice %56 {offsets = [32, 0], sizes = [32, 128], strides = [1, 1]} : vector<64x128xf32> to vector<32x128xf32>
    %61 = arith.addf %24, %60 : vector<32x128xf32>
    %62 = vector.extract_strided_slice %59 {offsets = [0, 124], sizes = [32, 4], strides = [1, 1]} : vector<32x128xf32> to vector<32x4xf32>
    %63 = vector.extract_strided_slice %59 {offsets = [0, 0], sizes = [32, 124], strides = [1, 1]} : vector<32x128xf32> to vector<32x124xf32>
    %64 = tpu.concatenate %62, %63 in 1 : vector<32x4xf32>, vector<32x124xf32> -> vector<32x128xf32>
    %65 = vector.extract_strided_slice %59 {offsets = [0, 126], sizes = [32, 2], strides = [1, 1]} : vector<32x128xf32> to vector<32x2xf32>
    %66 = vector.extract_strided_slice %59 {offsets = [0, 0], sizes = [32, 126], strides = [1, 1]} : vector<32x128xf32> to vector<32x126xf32>
    %67 = tpu.concatenate %65, %66 in 1 : vector<32x2xf32>, vector<32x126xf32> -> vector<32x128xf32>
    %68 = vector.extract_strided_slice %59 {offsets = [0, 2], sizes = [32, 126], strides = [1, 1]} : vector<32x128xf32> to vector<32x126xf32>
    %69 = vector.extract_strided_slice %59 {offsets = [0, 0], sizes = [32, 2], strides = [1, 1]} : vector<32x128xf32> to vector<32x2xf32>
    %70 = tpu.concatenate %68, %69 in 1 : vector<32x126xf32>, vector<32x2xf32> -> vector<32x128xf32>
    %71 = vector.extract_strided_slice %59 {offsets = [0, 4], sizes = [32, 124], strides = [1, 1]} : vector<32x128xf32> to vector<32x124xf32>
    %72 = vector.extract_strided_slice %59 {offsets = [0, 0], sizes = [32, 4], strides = [1, 1]} : vector<32x128xf32> to vector<32x4xf32>
    %73 = tpu.concatenate %71, %72 in 1 : vector<32x124xf32>, vector<32x4xf32> -> vector<32x128xf32>
    %74 = tpu.concatenate %64, %67, %59, %70, %73 in 0 : vector<32x128xf32>, vector<32x128xf32>, vector<32x128xf32>, vector<32x128xf32>, vector<32x128xf32> -> vector<160x128xf32>
    %c160_27 = arith.constant 160 : index
    %c0_28 = arith.constant 0 : index
    %75 = vector.load %arg2[%c160_27, %c0_28] : memref<424x161xf32, #tpu.memory_space<vmem>>, vector<64x160xf32>
    %c160_29 = arith.constant 160 : index
    %c160_30 = arith.constant 160 : index
    %76 = vector.load %arg2[%c160_29, %c160_30] : memref<424x161xf32, #tpu.memory_space<vmem>>, vector<64x1xf32>
    %cst_31 = arith.constant dense<0.000000e+00> : vector<64x128xf32>
    %77 = tpu.matmul %75, %74, %cst_31 {dimension_numbers = #tpu.dot_dimension_numbers<[1], [0], [0], [1], [0, 0, 1, 1], [], []>} : vector<64x160xf32>, vector<160x128xf32>, vector<64x128xf32> -> vector<64x128xf32>
    %78 = vector.broadcast %76 : vector<64x1xf32> to vector<64x128xf32>
    %79 = arith.addf %77, %78 : vector<64x128xf32>
    %80 = vector.extract_strided_slice %79 {offsets = [0, 0], sizes = [32, 128], strides = [1, 1]} : vector<64x128xf32> to vector<32x128xf32>
    %81 = math.tanh %80 : vector<32x128xf32>
    %82 = vector.extract_strided_slice %79 {offsets = [32, 0], sizes = [32, 128], strides = [1, 1]} : vector<64x128xf32> to vector<32x128xf32>
    %83 = arith.negf %82 : vector<32x128xf32>
    %84 = math.exp %83 : vector<32x128xf32>
    %cst_32 = arith.constant 1.000000e+00 : f32
    %85 = vector.broadcast %cst_32 : f32 to vector<32x128xf32>
    %86 = arith.addf %85, %84 : vector<32x128xf32>
    %87 = arith.divf %85, %86 : vector<32x128xf32>
    %88 = arith.mulf %81, %87 : vector<32x128xf32>
    %c224 = arith.constant 224 : index
    %c0_33 = arith.constant 0 : index
    %89 = vector.load %arg2[%c224, %c0_33] : memref<424x161xf32, #tpu.memory_space<vmem>>, vector<64x32xf32>
    %c224_34 = arith.constant 224 : index
    %c160_35 = arith.constant 160 : index
    %90 = vector.load %arg2[%c224_34, %c160_35] : memref<424x161xf32, #tpu.memory_space<vmem>>, vector<64x1xf32>
    %cst_36 = arith.constant dense<0.000000e+00> : vector<64x128xf32>
    %91 = tpu.matmul %89, %88, %cst_36 {dimension_numbers = #tpu.dot_dimension_numbers<[1], [0], [0], [1], [0, 0, 1, 1], [], []>} : vector<64x32xf32>, vector<32x128xf32>, vector<64x128xf32> -> vector<64x128xf32>
    %92 = vector.broadcast %90 : vector<64x1xf32> to vector<64x128xf32>
    %93 = arith.addf %91, %92 : vector<64x128xf32>
    %94 = vector.extract_strided_slice %93 {offsets = [0, 0], sizes = [32, 128], strides = [1, 1]} : vector<64x128xf32> to vector<32x128xf32>
    %95 = arith.addf %59, %94 : vector<32x128xf32>
    %96 = arith.mulf %95, %17 : vector<32x128xf32>
    %97 = vector.extract_strided_slice %93 {offsets = [32, 0], sizes = [32, 128], strides = [1, 1]} : vector<64x128xf32> to vector<32x128xf32>
    %98 = arith.addf %61, %97 : vector<32x128xf32>
    %99 = vector.extract_strided_slice %96 {offsets = [0, 120], sizes = [32, 8], strides = [1, 1]} : vector<32x128xf32> to vector<32x8xf32>
    %100 = vector.extract_strided_slice %96 {offsets = [0, 0], sizes = [32, 120], strides = [1, 1]} : vector<32x128xf32> to vector<32x120xf32>
    %101 = tpu.concatenate %99, %100 in 1 : vector<32x8xf32>, vector<32x120xf32> -> vector<32x128xf32>
    %102 = vector.extract_strided_slice %96 {offsets = [0, 124], sizes = [32, 4], strides = [1, 1]} : vector<32x128xf32> to vector<32x4xf32>
    %103 = vector.extract_strided_slice %96 {offsets = [0, 0], sizes = [32, 124], strides = [1, 1]} : vector<32x128xf32> to vector<32x124xf32>
    %104 = tpu.concatenate %102, %103 in 1 : vector<32x4xf32>, vector<32x124xf32> -> vector<32x128xf32>
    %105 = vector.extract_strided_slice %96 {offsets = [0, 4], sizes = [32, 124], strides = [1, 1]} : vector<32x128xf32> to vector<32x124xf32>
    %106 = vector.extract_strided_slice %96 {offsets = [0, 0], sizes = [32, 4], strides = [1, 1]} : vector<32x128xf32> to vector<32x4xf32>
    %107 = tpu.concatenate %105, %106 in 1 : vector<32x124xf32>, vector<32x4xf32> -> vector<32x128xf32>
    %108 = vector.extract_strided_slice %96 {offsets = [0, 8], sizes = [32, 120], strides = [1, 1]} : vector<32x128xf32> to vector<32x120xf32>
    %109 = vector.extract_strided_slice %96 {offsets = [0, 0], sizes = [32, 8], strides = [1, 1]} : vector<32x128xf32> to vector<32x8xf32>
    %110 = tpu.concatenate %108, %109 in 1 : vector<32x120xf32>, vector<32x8xf32> -> vector<32x128xf32>
    %111 = tpu.concatenate %101, %104, %96, %107, %110 in 0 : vector<32x128xf32>, vector<32x128xf32>, vector<32x128xf32>, vector<32x128xf32>, vector<32x128xf32> -> vector<160x128xf32>
    %c288 = arith.constant 288 : index
    %c0_37 = arith.constant 0 : index
    %112 = vector.load %arg2[%c288, %c0_37] : memref<424x161xf32, #tpu.memory_space<vmem>>, vector<64x160xf32>
    %c288_38 = arith.constant 288 : index
    %c160_39 = arith.constant 160 : index
    %113 = vector.load %arg2[%c288_38, %c160_39] : memref<424x161xf32, #tpu.memory_space<vmem>>, vector<64x1xf32>
    %cst_40 = arith.constant dense<0.000000e+00> : vector<64x128xf32>
    %114 = tpu.matmul %112, %111, %cst_40 {dimension_numbers = #tpu.dot_dimension_numbers<[1], [0], [0], [1], [0, 0, 1, 1], [], []>} : vector<64x160xf32>, vector<160x128xf32>, vector<64x128xf32> -> vector<64x128xf32>
    %115 = vector.broadcast %113 : vector<64x1xf32> to vector<64x128xf32>
    %116 = arith.addf %114, %115 : vector<64x128xf32>
    %117 = vector.extract_strided_slice %116 {offsets = [0, 0], sizes = [32, 128], strides = [1, 1]} : vector<64x128xf32> to vector<32x128xf32>
    %118 = math.tanh %117 : vector<32x128xf32>
    %119 = vector.extract_strided_slice %116 {offsets = [32, 0], sizes = [32, 128], strides = [1, 1]} : vector<64x128xf32> to vector<32x128xf32>
    %120 = arith.negf %119 : vector<32x128xf32>
    %121 = math.exp %120 : vector<32x128xf32>
    %cst_41 = arith.constant 1.000000e+00 : f32
    %122 = vector.broadcast %cst_41 : f32 to vector<32x128xf32>
    %123 = arith.addf %122, %121 : vector<32x128xf32>
    %124 = arith.divf %122, %123 : vector<32x128xf32>
    %125 = arith.mulf %118, %124 : vector<32x128xf32>
    %c352 = arith.constant 352 : index
    %c0_42 = arith.constant 0 : index
    %126 = vector.load %arg2[%c352, %c0_42] : memref<424x161xf32, #tpu.memory_space<vmem>>, vector<32x32xf32>
    %c352_43 = arith.constant 352 : index
    %c160_44 = arith.constant 160 : index
    %127 = vector.load %arg2[%c352_43, %c160_44] : memref<424x161xf32, #tpu.memory_space<vmem>>, vector<32x1xf32>
    %cst_45 = arith.constant dense<0.000000e+00> : vector<32x128xf32>
    %128 = tpu.matmul %126, %125, %cst_45 {dimension_numbers = #tpu.dot_dimension_numbers<[1], [0], [0], [1], [0, 0, 1, 1], [], []>} : vector<32x32xf32>, vector<32x128xf32>, vector<32x128xf32> -> vector<32x128xf32>
    %129 = arith.addf %98, %128 : vector<32x128xf32>
    %130 = vector.broadcast %127 : vector<32x1xf32> to vector<32x128xf32>
    %131 = arith.addf %129, %130 : vector<32x128xf32>
    %132 = arith.mulf %131, %17 : vector<32x128xf32>
    %c416 = arith.constant 416 : index
    %c0_46 = arith.constant 0 : index
    %133 = vector.load %arg2[%c416, %c0_46] : memref<424x161xf32, #tpu.memory_space<vmem>>, vector<4x32xf32>
    %c416_47 = arith.constant 416 : index
    %c160_48 = arith.constant 160 : index
    %134 = vector.load %arg2[%c416_47, %c160_48] : memref<424x161xf32, #tpu.memory_space<vmem>>, vector<4x1xf32>
    %cst_49 = arith.constant dense<0.000000e+00> : vector<4x128xf32>
    %135 = tpu.matmul %133, %132, %cst_49 {dimension_numbers = #tpu.dot_dimension_numbers<[1], [0], [0], [1], [0, 0, 1, 1], [], []>} : vector<4x32xf32>, vector<32x128xf32>, vector<4x128xf32> -> vector<4x128xf32>
    %136 = vector.broadcast %134 : vector<4x1xf32> to vector<4x128xf32>
    %137 = arith.addf %135, %136 : vector<4x128xf32>
    %138 = vector.extract_strided_slice %17 {offsets = [0, 0], sizes = [4, 128], strides = [1, 1]} : vector<32x128xf32> to vector<4x128xf32>
    %139 = arith.mulf %137, %138 : vector<4x128xf32>
    %140 = vector.extract_strided_slice %139 {offsets = [0, 0], sizes = [2, 128], strides = [1, 1]} : vector<4x128xf32> to vector<2x128xf32>
    %141 = vector.extract_strided_slice %139 {offsets = [2, 0], sizes = [2, 128], strides = [1, 1]} : vector<4x128xf32> to vector<2x128xf32>
    %142 = math.exp %141 : vector<2x128xf32>
    %143 = arith.mulf %15, %142 : vector<2x128xf32>
    %144 = vector.extract_strided_slice %17 {offsets = [0, 0], sizes = [2, 128], strides = [1, 1]} : vector<32x128xf32> to vector<2x128xf32>
    %145 = arith.mulf %143, %144 : vector<2x128xf32>
    %146 = arith.addf %140, %145 : vector<2x128xf32>
    %147 = vector.extract_strided_slice %14 {offsets = [0, 8], sizes = [2, 16], strides = [1, 1]} : vector<2x128xf32> to vector<2x16xf32>
    %148 = vector.extract_strided_slice %146 {offsets = [0, 8], sizes = [2, 16], strides = [1, 1]} : vector<2x128xf32> to vector<2x16xf32>
    %149 = tpu.concatenate %147, %148 in 0 : vector<2x16xf32>, vector<2x16xf32> -> vector<4x16xf32>
    %c0_50 = arith.constant 0 : index
    %c0_51 = arith.constant 0 : index
    %c0_52 = arith.constant 0 : index
    %150 = vector.load %arg3[%c0_50, %c0_51, %c0_52] : memref<2x4x16xf32, #tpu.memory_space<vmem>>, vector<1x4x16xf32>
    %151 = vector.shape_cast %150 : vector<1x4x16xf32> to vector<4x16xf32>
    %152 = vector.shape_cast %149 : vector<4x16xf32> to vector<1x4x16xf32>
    tpu.vector_store %arg3[%c0_50, %c0_51, %c0_52], %152 {strides = array<i32>} : memref<2x4x16xf32, #tpu.memory_space<vmem>>, vector<1x4x16xf32>,
    %153 = vector.extract_strided_slice %141 {offsets = [0, 8], sizes = [2, 16], strides = [1, 1]} : vector<2x128xf32> to vector<2x16xf32>
    %cst_53 = arith.constant dense<0.000000e+00> : vector<2xf32>
    %154 = vector.multi_reduction <add>, %153, %cst_53 [1] : vector<2x16xf32> to vector<2xf32>
    %155 = vector.shape_cast %154 : vector<2xf32> to vector<2x1xf32>
    %cst_54 = arith.constant dense<0.000000e+00> : vector<1xf32>
    %156 = vector.multi_reduction <add>, %155, %cst_54 [0] : vector<2x1xf32> to vector<1xf32>
    %157 = vector.shape_cast %156 : vector<1xf32> to vector<1x1xf32>
    %158 = vector.extract_strided_slice %14 {offsets = [0, 32], sizes = [2, 16], strides = [1, 1]} : vector<2x128xf32> to vector<2x16xf32>
    %159 = vector.extract_strided_slice %146 {offsets = [0, 32], sizes = [2, 16], strides = [1, 1]} : vector<2x128xf32> to vector<2x16xf32>
    %160 = tpu.concatenate %158, %159 in 0 : vector<2x16xf32>, vector<2x16xf32> -> vector<4x16xf32>
    %c1_55 = arith.constant 1 : index
    %c0_56 = arith.constant 0 : index
    %c0_57 = arith.constant 0 : index
    %161 = vector.load %arg3[%c1_55, %c0_56, %c0_57] : memref<2x4x16xf32, #tpu.memory_space<vmem>>, vector<1x4x16xf32>
    %162 = vector.shape_cast %161 : vector<1x4x16xf32> to vector<4x16xf32>
    %163 = vector.shape_cast %160 : vector<4x16xf32> to vector<1x4x16xf32>
    tpu.vector_store %arg3[%c1_55, %c0_56, %c0_57], %163 {strides = array<i32>} : memref<2x4x16xf32, #tpu.memory_space<vmem>>, vector<1x4x16xf32>,
    %164 = vector.extract_strided_slice %141 {offsets = [0, 32], sizes = [2, 16], strides = [1, 1]} : vector<2x128xf32> to vector<2x16xf32>
    %cst_58 = arith.constant dense<0.000000e+00> : vector<2xf32>
    %165 = vector.multi_reduction <add>, %164, %cst_58 [1] : vector<2x16xf32> to vector<2xf32>
    %166 = vector.shape_cast %165 : vector<2xf32> to vector<2x1xf32>
    %cst_59 = arith.constant dense<0.000000e+00> : vector<1xf32>
    %167 = vector.multi_reduction <add>, %166, %cst_59 [0] : vector<2x1xf32> to vector<1xf32>
    %168 = vector.shape_cast %167 : vector<1xf32> to vector<1x1xf32>
    %169 = tpu.concatenate %157, %168 in 0 : vector<1x1xf32>, vector<1x1xf32> -> vector<2x1xf32>
    %c0_60 = arith.constant 0 : index
    %c0_61 = arith.constant 0 : index
    %170 = vector.load %arg4[%c0_60, %c0_61] : memref<2x1xf32, #tpu.memory_space<vmem>>, vector<2x1xf32>
    tpu.vector_store %arg4[%c0_60, %c0_61], %169 {strides = array<i32>} : memref<2x1xf32, #tpu.memory_space<vmem>>, vector<2x1xf32>,
    return
  }
}

</mosaic_0001>

<llo_original>
// kernel: tpu_custom_call.1
$region0: #{tpu_custom_call.1}
  #allocation0 [shape = 'u32[]', space=smem, size = 0x4, offset = 0x4, fixed_abs, tag = 'smem constant byte address 0x4 - core index']
  #allocation1 [shape = 'u32[72,128]{1,0:T(1,128)}', space=vmem, size = 0x9000, scoped, tag = 'internal scratch']
  %s0 = inlined_call_operand.vmem [shape: f32[2,4,16], index: 0, kind: input, shape index: {}]
  %s1 = inlined_call_operand.vmem [shape: f32[2,1,16], index: 1, kind: input, shape index: {}]
  %s2 = inlined_call_operand.vmem [shape: f32[424,161], index: 2, kind: input, shape index: {}]
  %s3 = inlined_call_operand.hbm [shape: f32[2,4,16], index: 3, kind: output, shape index: {0}]
  %s4 = inlined_call_operand.vmem [shape: f32[2,1], index: 4, kind: output, shape index: {1}]
  %5 = xla_tuple %s3, %s4
  %s6 = sld [smem:[#allocation0]]
  $region30: #{tpu_custom_call.1} parent=0
    _
  %s8 = ssub.s32 1, %s6
  %s9 = scalar_select 0, %s8, %s6
  $region1: #{tpu_custom_call.1} parent=0
    #allocation2 [shape = 'u8[4096]{0}', space=vmem, size = 0x1000, scoped, tag = 'output window, operand 0, single buffered']
    #allocation3 [shape = 's32[1]{0}', space=sflag, size = 0x4, scoped, tag = 'scoped memory for tpu_custom_call.1']
    %10 = vsyncpa [#allocation3], 0
    // Predicated region
    $region2: #{tpu_custom_call.1} parent=1 // pred_check
      _
    $region3: #{tpu_custom_call.1} parent=1 // pred_check_branch
      %12 = sbr.rel (0) target = $region5
    $region4: #{tpu_custom_call.1} parent=1 // pred_region
      _
    $region5: #{tpu_custom_call.1} parent=1 // pred_fallthru
      _
    // Predicated region
    $region6: #{tpu_custom_call.1} parent=1 // pred_check
      _
    $region7: #{tpu_custom_call.1} parent=1 // pred_check_branch
      %14 = sbr.rel (0) target = $region9
    $region8: #{tpu_custom_call.1} parent=1 // pred_region
      _
    $region9: #{tpu_custom_call.1} parent=1 // pred_fallthru
      _
    // Predicated region
    $region10: #{tpu_custom_call.1} parent=1 // pred_check
      _
    $region11: #{tpu_custom_call.1} parent=1 // pred_check_branch
      %16 = sbr.rel (0) target = $region13
    $region12: #{tpu_custom_call.1} parent=1 // pred_region
      _
    $region13: #{tpu_custom_call.1} parent=1 // pred_fallthru
      _
    %v17 = vld [vmem:[%s0] sm:$0xf]
    %v18 = vld [vmem:[%s1] sm:$0x1]
    %s19 = scalar_lea.vmem %s0, 4
    %v20 = vld [vmem:[%s19] sm:$0xf]
    %s21 = scalar_lea.vmem %s1, 1
    %v22 = vld [vmem:[%s21] sm:$0x1]
    %24 = vrot.lane.b32.xlu0 %v17, 8
    %v25 = vpop.permute.xlu0 %24
    %28 = vrot.lane.b32.xlu0 %v20, 32
    %v29 = vpop.permute.xlu0 %28
    %vm31 = vcmask 64512
    %v32 = vsel %vm31, 0.0, %v25
    %vm33 = vcmask 195584
    %v34 = vsel %vm33, %v32, 0.0
    %vm35 = vcmask 261120
    %v36 = vsel %vm35, %v34, %v29
    %vm37 = vcmask 392192
    %v38 = vsel %vm37, %v36, 0.0
    %vm39 = vcmask 457728
    %v40 = vsel %vm39, %v38, 0.0
    %v42 = vperm.slane %v18, 0
    %43 = vrot.lane.b32.xlu0 %v42, 8
    %v44 = vpop.permute.xlu0 %43
    %v47 = vperm.slane %v22, 0
    %48 = vrot.lane.b32.xlu0 %v47, 32
    %v49 = vpop.permute.xlu0 %48
    %v51 = vsel %vm31, 0.0, %v44
    %v52 = vsel %vm33, %v51, 0.0
    %v53 = vsel %vm35, %v52, %v49
    %v54 = vsel %vm37, %v53, 0.0
    %v55 = vsel %vm39, %v54, 0.0
    %v56 = vperm.slane %v55, 0
    %v57 = vld [vmem:[%s2] sm:$0xff]
    %v58 = vld [vmem:[%s2 + $0x10] sm:$0xff]
    %v59 = vld [vmem:[%s2 + $0x20] sm:$0xff]
    %v60 = vld [vmem:[%s2 + $0x30] sm:$0xff]
    %v61 = vld [vmem:[%s2 + $0x8] sm:$0xff]
    %v62 = vld [vmem:[%s2 + $0x18] sm:$0xff]
    %v63 = vld [vmem:[%s2 + $0x28] sm:$0xff]
    %v64 = vld [vmem:[%s2 + $0x38] sm:$0xff]
    %66 = vset.pattern.permute.xlu0 32
    %67 = vperm.xlu0 %66, %v61
    %v68 = vpop.permute.xlu0 %67
    %71 = vset.pattern.permute.xlu0 32
    %72 = vperm.xlu0 %71, %v62
    %v73 = vpop.permute.xlu0 %72
    %76 = vset.pattern.permute.xlu0 32
    %77 = vperm.xlu0 %76, %v63
    %v78 = vpop.permute.xlu0 %77
    %81 = vset.pattern.permute.xlu0 32
    %82 = vperm.xlu0 %81, %v64
    %v83 = vpop.permute.xlu0 %82
    %vm85 = vcmask 15360
    %v87 = vsel %vm85, %v57, 0
    %v90 = vsel %vm85, %v58, 0
    %v93 = vsel %vm85, %v59, 0
    %v96 = vsel %vm85, %v60, 0
    %vm98 = vcmask 1041408
    %v100 = vsel %vm98, %v40, 0
    %102 = vmatpush.msra.mxu0 0.0
    %103 = vmatpush.msra.mxu0 0.0
    %104 = vmatpush.msra.mxu0 0.0
    %105 = vmatpush.msra.mxu0 0.0
    %106 = vmatpush.msra.mxu0 0.0
    %107 = vmatpush.msra.mxu0 0.0
    %108 = vmatpush.msra.mxu0 0.0
    %109 = vmatpush.msra.mxu0 0.0
    %110 = vmatpush.msra.mxu0 0.0
    %111 = vmatpush.msra.mxu0 0.0
    %112 = vmatpush.msra.mxu0 0.0
    %113 = vmatpush.msra.mxu0 0.0
    %114 = vmatpush.msra.mxu0 0.0
    %115 = vmatpush.msra.mxu0 0.0
    %116 = vmatpush.msra.mxu0 0.0
    %117 = vmatpush.msra.mxu0 %v100
    %118 = vmatmul.f32.gmra.mxu0 %v87
    %v119 = vpop.f32.mrf.mxu0
    %v120 = vadd.f32 %v68, %v119
    %121 = vmatmul.f32.gmra.mxu0 %v90
    %v122 = vpop.f32.mrf.mxu0
    %v123 = vadd.f32 %v73, %v122
    %124 = vmatmul.f32.gmra.mxu0 %v93
    %v125 = vpop.f32.mrf.mxu0
    %v126 = vadd.f32 %v78, %v125
    %127 = vmatmul.f32.gmra.mxu0 %v96
    %v128 = vpop.f32.mrf.mxu0
    %v129 = vadd.f32 %v83, %v128
    %130 = vdwg.mxu0
    %v131 = vmul.f32 %v120, %v56
    %v132 = vmul.f32 %v123, %v56
    %v133 = vmul.f32 %v126, %v56
    %v134 = vmul.f32 %v129, %v56
    %139 = vrot.lane.b32.xlu0 %v131, 2
    %v140 = vpop.permute.xlu0 %139
    %141 = vrot.lane.b32.xlu0 %v132, 2
    %v142 = vpop.permute.xlu0 %141
    %143 = vrot.lane.b32.xlu0 %v133, 2
    %v144 = vpop.permute.xlu0 %143
    %145 = vrot.lane.b32.xlu0 %v134, 2
    %v146 = vpop.permute.xlu0 %145
    %151 = vrot.lane.b32.xlu0 %v131, 1
    %v152 = vpop.permute.xlu0 %151
    %153 = vrot.lane.b32.xlu0 %v132, 1
    %v154 = vpop.permute.xlu0 %153
    %155 = vrot.lane.b32.xlu0 %v133, 1
    %v156 = vpop.permute.xlu0 %155
    %157 = vrot.lane.b32.xlu0 %v134, 1
    %v158 = vpop.permute.xlu0 %157
    %163 = vrot.lane.b32.xlu0 %v131, 127
    %v164 = vpop.permute.xlu0 %163
    %165 = vrot.lane.b32.xlu0 %v132, 127
    %v166 = vpop.permute.xlu0 %165
    %167 = vrot.lane.b32.xlu0 %v133, 127
    %v168 = vpop.permute.xlu0 %167
    %169 = vrot.lane.b32.xlu0 %v134, 127
    %v170 = vpop.permute.xlu0 %169
    %175 = vrot.lane.b32.xlu0 %v131, 126
    %v176 = vpop.permute.xlu0 %175
    %177 = vrot.lane.b32.xlu0 %v132, 126
    %v178 = vpop.permute.xlu0 %177
    %179 = vrot.lane.b32.xlu0 %v133, 126
    %v180 = vpop.permute.xlu0 %179
    %181 = vrot.lane.b32.xlu0 %v134, 126
    %v182 = vpop.permute.xlu0 %181
    %v187 = vld [vmem:[%s2 + $0x40] sm:$0xff]
    %v188 = vld [vmem:[%s2 + $0x48] sm:$0xff]
    %v189 = vld [vmem:[%s2 + $0x50] sm:$0xff]
    %v190 = vld [vmem:[%s2 + $0x58] sm:$0xff]
    %v191 = vld [vmem:[%s2 + $0x60] sm:$0xff]
    %v192 = vld [vmem:[%s2 + $0x68] sm:$0xff]
    %v193 = vld [vmem:[%s2 + $0x70] sm:$0xff]
    %v194 = vld [vmem:[%s2 + $0x78] sm:$0xff]
    %v195 = vld [vmem:[%s2 + $0x80] sm:$0xff]
    %v196 = vld [vmem:[%s2 + $0x88] sm:$0xff]
    %v197 = vld [vmem:[%s2 + $0x90] sm:$0xff]
    %v198 = vld [vmem:[%s2 + $0x98] sm:$0xff]
    %v199 = vld [vmem:[%s2 + $0xa0] sm:$0xff]
    %v200 = vld [vmem:[%s2 + $0xa8] sm:$0xff]
    %v201 = vld [vmem:[%s2 + $0xb0] sm:$0xff]
    %v202 = vld [vmem:[%s2 + $0xb8] sm:$0xff]
    %204 = vset.pattern.permute.xlu0 32
    %205 = vperm.xlu0 %204, %v188
    %v206 = vpop.permute.xlu0 %205
    %209 = vset.pattern.permute.xlu0 32
    %210 = vperm.xlu0 %209, %v190
    %v211 = vpop.permute.xlu0 %210
    %214 = vset.pattern.permute.xlu0 32
    %215 = vperm.xlu0 %214, %v192
    %v216 = vpop.permute.xlu0 %215
    %219 = vset.pattern.permute.xlu0 32
    %220 = vperm.xlu0 %219, %v194
    %v221 = vpop.permute.xlu0 %220
    %224 = vset.pattern.permute.xlu0 32
    %225 = vperm.xlu0 %224, %v196
    %v226 = vpop.permute.xlu0 %225
    %229 = vset.pattern.permute.xlu0 32
    %230 = vperm.xlu0 %229, %v198
    %v231 = vpop.permute.xlu0 %230
    %234 = vset.pattern.permute.xlu0 32
    %235 = vperm.xlu0 %234, %v200
    %v236 = vpop.permute.xlu0 %235
    %239 = vset.pattern.permute.xlu0 32
    %240 = vperm.xlu0 %239, %v202
    %v241 = vpop.permute.xlu0 %240
    %v243 = vsel %vm35, %v188, 0
    %v245 = vsel %vm35, %v190, 0
    %v247 = vsel %vm35, %v192, 0
    %v249 = vsel %vm35, %v194, 0
    %v251 = vsel %vm35, %v196, 0
    %v253 = vsel %vm35, %v198, 0
    %v255 = vsel %vm35, %v200, 0
    %v257 = vsel %vm35, %v202, 0
    %259 = vmatpush.msra.mxu0 %v170
    %260 = vmatpush.msra.mxu0 %v168
    %261 = vmatpush.msra.mxu0 %v166
    %262 = vmatpush.msra.mxu0 %v164
    %263 = vmatpush.msra.mxu0 %v134
    %264 = vmatpush.msra.mxu0 %v133
    %265 = vmatpush.msra.mxu0 %v132
    %266 = vmatpush.msra.mxu0 %v131
    %267 = vmatpush.msra.mxu0 %v158
    %268 = vmatpush.msra.mxu0 %v156
    %269 = vmatpush.msra.mxu0 %v154
    %270 = vmatpush.msra.mxu0 %v152
    %271 = vmatpush.msra.mxu0 %v146
    %272 = vmatpush.msra.mxu0 %v144
    %273 = vmatpush.msra.mxu0 %v142
    %274 = vmatpush.msra.mxu0 %v140
    %275 = vmatmul.f32.gmra.mxu0 %v187
    %v276 = vpop.f32.mrf.mxu0
    %v277 = vadd.f32 %v206, %v276
    %278 = vmatmul.f32.gmra.mxu0 %v189
    %v279 = vpop.f32.mrf.mxu0
    %v280 = vadd.f32 %v211, %v279
    %281 = vmatmul.f32.gmra.mxu0 %v191
    %v282 = vpop.f32.mrf.mxu0
    %v283 = vadd.f32 %v216, %v282
    %284 = vmatmul.f32.gmra.mxu0 %v193
    %v285 = vpop.f32.mrf.mxu0
    %v286 = vadd.f32 %v221, %v285
    %287 = vmatmul.f32.gmra.mxu0 %v195
    %v288 = vpop.f32.mrf.mxu0
    %v289 = vadd.f32 %v226, %v288
    %290 = vmatmul.f32.gmra.mxu0 %v197
    %v291 = vpop.f32.mrf.mxu0
    %v292 = vadd.f32 %v231, %v291
    %293 = vmatmul.f32.gmra.mxu0 %v199
    %v294 = vpop.f32.mrf.mxu0
    %v295 = vadd.f32 %v236, %v294
    %296 = vmatmul.f32.gmra.mxu0 %v201
    %v297 = vpop.f32.mrf.mxu0
    %v298 = vadd.f32 %v241, %v297
    %299 = vdwg.mxu0
    %300 = vmatpush.msra.mxu0 0.0
    %301 = vmatpush.msra.mxu0 0.0
    %302 = vmatpush.msra.mxu0 0.0
    %303 = vmatpush.msra.mxu0 0.0
    %304 = vmatpush.msra.mxu0 0.0
    %305 = vmatpush.msra.mxu0 0.0
    %306 = vmatpush.msra.mxu0 0.0
    %307 = vmatpush.msra.mxu0 0.0
    %308 = vmatpush.msra.mxu0 0.0
    %309 = vmatpush.msra.mxu0 0.0
    %310 = vmatpush.msra.mxu0 0.0
    %311 = vmatpush.msra.mxu0 0.0
    %312 = vmatpush.msra.mxu0 %v182
    %313 = vmatpush.msra.mxu0 %v180
    %314 = vmatpush.msra.mxu0 %v178
    %315 = vmatpush.msra.mxu0 %v176
    %316 = vmatmul.f32.gmra.mxu0 %v243
    %v317 = vpop.f32.mrf.mxu0
    %v318 = vadd.f32 %v277, %v317
    %319 = vmatmul.f32.gmra.mxu0 %v245
    %v320 = vpop.f32.mrf.mxu0
    %v321 = vadd.f32 %v280, %v320
    %322 = vmatmul.f32.gmra.mxu0 %v247
    %v323 = vpop.f32.mrf.mxu0
    %v324 = vadd.f32 %v283, %v323
    %325 = vmatmul.f32.gmra.mxu0 %v249
    %v326 = vpop.f32.mrf.mxu0
    %v327 = vadd.f32 %v286, %v326
    %328 = vmatmul.f32.gmra.mxu0 %v251
    %v329 = vpop.f32.mrf.mxu0
    %v330 = vadd.f32 %v289, %v329
    %331 = vmatmul.f32.gmra.mxu0 %v253
    %v332 = vpop.f32.mrf.mxu0
    %v333 = vadd.f32 %v292, %v332
    %334 = vmatmul.f32.gmra.mxu0 %v255
    %v335 = vpop.f32.mrf.mxu0
    %v336 = vadd.f32 %v295, %v335
    %337 = vmatmul.f32.gmra.mxu0 %v257
    %v338 = vpop.f32.mrf.mxu0
    %v339 = vadd.f32 %v298, %v338
    %340 = vdwg.mxu0
    %v341 = vtanh.pop %v318
    %v342 = vtanh.pop %v321
    %v343 = vtanh.pop %v324
    %v344 = vtanh.pop %v327
    %v345 = vxor.u32 %v330, 2147483648
    %v346 = vxor.u32 %v333, 2147483648
    %v347 = vxor.u32 %v336, 2147483648
    %v348 = vxor.u32 %v339, 2147483648
    %v349 = vmul.f32 %v345, 1.442695
    %v350 = vpow.pop %v349
    %v351 = vmul.f32 %v346, 1.442695
    %v352 = vpow.pop %v351
    %v353 = vmul.f32 %v347, 1.442695
    %v354 = vpow.pop %v353
    %v355 = vmul.f32 %v348, 1.442695
    %v356 = vpow.pop %v355
    %v357 = vadd.f32 %v350, 1.0
    %v358 = vadd.f32 %v352, 1.0
    %v359 = vadd.f32 %v354, 1.0
    %v360 = vadd.f32 %v356, 1.0
    %v361 = vrcp.pop %v357
    %v362 = vmul.f32 %v357, %v361
    %v363 = vsub.f32 1.0, %v362
    %v364 = vmul.f32 %v361, %v363
    %v365 = vadd.f32 %v361, %v364
    %vm366 = vweird.f32 %v357
    %vm367 = vweird.f32 %v361
    %vm368 = vmor %vm366, %vm367
    %v369 = vsel %vm368, %v361, %v365
    %v370 = vand.u32 2147483647, %v357
    %vm371 = vcmp.eq.f32.partialorder %v370, 8.507059e+37
    %v372 = vand.u32 %v357, 2147483648
    %v373 = vor.u32 1.1754944e-38, %v372
    %v374 = vsel %vm371, %v373, %v369
    %v375 = vmul.f32 1.0, %v374
    %v376 = vrcp.pop %v358
    %v377 = vmul.f32 %v358, %v376
    %v378 = vsub.f32 1.0, %v377
    %v379 = vmul.f32 %v376, %v378
    %v380 = vadd.f32 %v376, %v379
    %vm381 = vweird.f32 %v358
    %vm382 = vweird.f32 %v376
    %vm383 = vmor %vm381, %vm382
    %v384 = vsel %vm383, %v376, %v380
    %v385 = vand.u32 2147483647, %v358
    %vm386 = vcmp.eq.f32.partialorder %v385, 8.507059e+37
    %v387 = vand.u32 %v358, 2147483648
    %v388 = vor.u32 1.1754944e-38, %v387
    %v389 = vsel %vm386, %v388, %v384
    %v390 = vmul.f32 1.0, %v389
    %v391 = vrcp.pop %v359
    %v392 = vmul.f32 %v359, %v391
    %v393 = vsub.f32 1.0, %v392
    %v394 = vmul.f32 %v391, %v393
    %v395 = vadd.f32 %v391, %v394
    %vm396 = vweird.f32 %v359
    %vm397 = vweird.f32 %v391
    %vm398 = vmor %vm396, %vm397
    %v399 = vsel %vm398, %v391, %v395
    %v400 = vand.u32 2147483647, %v359
    %vm401 = vcmp.eq.f32.partialorder %v400, 8.507059e+37
    %v402 = vand.u32 %v359, 2147483648
    %v403 = vor.u32 1.1754944e-38, %v402
    %v404 = vsel %vm401, %v403, %v399
    %v405 = vmul.f32 1.0, %v404
    %v406 = vrcp.pop %v360
    %v407 = vmul.f32 %v360, %v406
    %v408 = vsub.f32 1.0, %v407
    %v409 = vmul.f32 %v406, %v408
    %v410 = vadd.f32 %v406, %v409
    %vm411 = vweird.f32 %v360
    %vm412 = vweird.f32 %v406
    %vm413 = vmor %vm411, %vm412
    %v414 = vsel %vm413, %v406, %v410
    %v415 = vand.u32 2147483647, %v360
    %vm416 = vcmp.eq.f32.partialorder %v415, 8.507059e+37
    %v417 = vand.u32 %v360, 2147483648
    %v418 = vor.u32 1.1754944e-38, %v417
    %v419 = vsel %vm416, %v418, %v414
    %v420 = vmul.f32 1.0, %v419
    %v421 = vmul.f32 %v341, %v375
    %v422 = vmul.f32 %v342, %v390
    %v423 = vmul.f32 %v343, %v405
    %v424 = vmul.f32 %v344, %v420
    %v425 = vld [vmem:[%s2 + $0xc0] sm:$0xff]
    %v426 = vld [vmem:[%s2 + $0xd0] sm:$0xff]
    %v427 = vld [vmem:[%s2 + $0xe0] sm:$0xff]
    %v428 = vld [vmem:[%s2 + $0xf0] sm:$0xff]
    %v429 = vld [vmem:[%s2 + $0x100] sm:$0xff]
    %v430 = vld [vmem:[%s2 + $0x110] sm:$0xff]
    %v431 = vld [vmem:[%s2 + $0x120] sm:$0xff]
    %v432 = vld [vmem:[%s2 + $0x130] sm:$0xff]
    %v433 = vld [vmem:[%s2 + $0xc8] sm:$0xff]
    %v434 = vld [vmem:[%s2 + $0xd8] sm:$0xff]
    %v435 = vld [vmem:[%s2 + $0xe8] sm:$0xff]
    %v436 = vld [vmem:[%s2 + $0xf8] sm:$0xff]
    %v437 = vld [vmem:[%s2 + $0x108] sm:$0xff]
    %v438 = vld [vmem:[%s2 + $0x118] sm:$0xff]
    %v439 = vld [vmem:[%s2 + $0x128] sm:$0xff]
    %v440 = vld [vmem:[%s2 + $0x138] sm:$0xff]
    %442 = vset.pattern.permute.xlu0 32
    %443 = vperm.xlu0 %442, %v433
    %v444 = vpop.permute.xlu0 %443
    %447 = vset.pattern.permute.xlu0 32
    %448 = vperm.xlu0 %447, %v434
    %v449 = vpop.permute.xlu0 %448
    %452 = vset.pattern.permute.xlu0 32
    %453 = vperm.xlu0 %452, %v435
    %v454 = vpop.permute.xlu0 %453
    %457 = vset.pattern.permute.xlu0 32
    %458 = vperm.xlu0 %457, %v436
    %v459 = vpop.permute.xlu0 %458
    %462 = vset.pattern.permute.xlu0 32
    %463 = vperm.xlu0 %462, %v437
    %v464 = vpop.permute.xlu0 %463
    %467 = vset.pattern.permute.xlu0 32
    %468 = vperm.xlu0 %467, %v438
    %v469 = vpop.permute.xlu0 %468
    %472 = vset.pattern.permute.xlu0 32
    %473 = vperm.xlu0 %472, %v439
    %v474 = vpop.permute.xlu0 %473
    %477 = vset.pattern.permute.xlu0 32
    %478 = vperm.xlu0 %477, %v440
    %v479 = vpop.permute.xlu0 %478
    %v482 = vsel %vm35, %v425, 0
    %v485 = vsel %vm35, %v426, 0
    %v488 = vsel %vm35, %v427, 0
    %v491 = vsel %vm35, %v428, 0
    %v494 = vsel %vm35, %v429, 0
    %v497 = vsel %vm35, %v430, 0
    %v500 = vsel %vm35, %v431, 0
    %v503 = vsel %vm35, %v432, 0
    %505 = vmatpush.msra.mxu0 0.0
    %506 = vmatpush.msra.mxu0 0.0
    %507 = vmatpush.msra.mxu0 0.0
    %508 = vmatpush.msra.mxu0 0.0
    %509 = vmatpush.msra.mxu0 0.0
    %510 = vmatpush.msra.mxu0 0.0
    %511 = vmatpush.msra.mxu0 0.0
    %512 = vmatpush.msra.mxu0 0.0
    %513 = vmatpush.msra.mxu0 0.0
    %514 = vmatpush.msra.mxu0 0.0
    %515 = vmatpush.msra.mxu0 0.0
    %516 = vmatpush.msra.mxu0 0.0
    %517 = vmatpush.msra.mxu0 %v424
    %518 = vmatpush.msra.mxu0 %v423
    %519 = vmatpush.msra.mxu0 %v422
    %520 = vmatpush.msra.mxu0 %v421
    %521 = vmatmul.f32.gmra.mxu0 %v482
    %v522 = vpop.f32.mrf.mxu0
    %v523 = vadd.f32 %v444, %v522
    %524 = vmatmul.f32.gmra.mxu0 %v485
    %v525 = vpop.f32.mrf.mxu0
    %v526 = vadd.f32 %v449, %v525
    %527 = vmatmul.f32.gmra.mxu0 %v488
    %v528 = vpop.f32.mrf.mxu0
    %v529 = vadd.f32 %v454, %v528
    %530 = vmatmul.f32.gmra.mxu0 %v491
    %v531 = vpop.f32.mrf.mxu0
    %v532 = vadd.f32 %v459, %v531
    %533 = vmatmul.f32.gmra.mxu0 %v494
    %v534 = vpop.f32.mrf.mxu0
    %v535 = vadd.f32 %v464, %v534
    %536 = vmatmul.f32.gmra.mxu0 %v497
    %v537 = vpop.f32.mrf.mxu0
    %v538 = vadd.f32 %v469, %v537
    %539 = vmatmul.f32.gmra.mxu0 %v500
    %v540 = vpop.f32.mrf.mxu0
    %v541 = vadd.f32 %v474, %v540
    %542 = vmatmul.f32.gmra.mxu0 %v503
    %v543 = vpop.f32.mrf.mxu0
    %v544 = vadd.f32 %v479, %v543
    %545 = vdwg.mxu0
    %v546 = vadd.f32 %v131, %v523
    %v547 = vadd.f32 %v132, %v526
    %v548 = vadd.f32 %v133, %v529
    %v549 = vadd.f32 %v134, %v532
    %v550 = vmul.f32 %v546, %v56
    %v551 = vmul.f32 %v547, %v56
    %v552 = vmul.f32 %v548, %v56
    %v553 = vmul.f32 %v549, %v56
    %v554 = vadd.f32 %v535, 0.0
    %v555 = vadd.f32 %v538, 0.0
    %v556 = vadd.f32 %v541, 0.0
    %v557 = vadd.f32 %v544, 0.0
    %562 = vrot.lane.b32.xlu0 %v550, 4
    %v563 = vpop.permute.xlu0 %562
    %564 = vrot.lane.b32.xlu0 %v551, 4
    %v565 = vpop.permute.xlu0 %564
    %566 = vrot.lane.b32.xlu0 %v552, 4
    %v567 = vpop.permute.xlu0 %566
    %568 = vrot.lane.b32.xlu0 %v553, 4
    %v569 = vpop.permute.xlu0 %568
    %574 = vrot.lane.b32.xlu0 %v550, 2
    %v575 = vpop.permute.xlu0 %574
    %576 = vrot.lane.b32.xlu0 %v551, 2
    %v577 = vpop.permute.xlu0 %576
    %578 = vrot.lane.b32.xlu0 %v552, 2
    %v579 = vpop.permute.xlu0 %578
    %580 = vrot.lane.b32.xlu0 %v553, 2
    %v581 = vpop.permute.xlu0 %580
    %586 = vrot.lane.b32.xlu0 %v550, 126
    %v587 = vpop.permute.xlu0 %586
    %588 = vrot.lane.b32.xlu0 %v551, 126
    %v589 = vpop.permute.xlu0 %588
    %590 = vrot.lane.b32.xlu0 %v552, 126
    %v591 = vpop.permute.xlu0 %590
    %592 = vrot.lane.b32.xlu0 %v553, 126
    %v593 = vpop.permute.xlu0 %592
    %598 = vrot.lane.b32.xlu0 %v550, 124
    %v599 = vpop.permute.xlu0 %598
    %600 = vrot.lane.b32.xlu0 %v551, 124
    %v601 = vpop.permute.xlu0 %600
    %602 = vrot.lane.b32.xlu0 %v552, 124
    %v603 = vpop.permute.xlu0 %602
    %604 = vrot.lane.b32.xlu0 %v553, 124
    %v605 = vpop.permute.xlu0 %604
    %v610 = vld [vmem:[%s2 + $0x140] sm:$0xff]
    %v611 = vld [vmem:[%s2 + $0x148] sm:$0xff]
    %v612 = vld [vmem:[%s2 + $0x150] sm:$0xff]
    %v613 = vld [vmem:[%s2 + $0x158] sm:$0xff]
    %v614 = vld [vmem:[%s2 + $0x160] sm:$0xff]
    %v615 = vld [vmem:[%s2 + $0x168] sm:$0xff]
    %v616 = vld [vmem:[%s2 + $0x170] sm:$0xff]
    %v617 = vld [vmem:[%s2 + $0x178] sm:$0xff]
    %v618 = vld [vmem:[%s2 + $0x180] sm:$0xff]
    %v619 = vld [vmem:[%s2 + $0x188] sm:$0xff]
    %v620 = vld [vmem:[%s2 + $0x190] sm:$0xff]
    %v621 = vld [vmem:[%s2 + $0x198] sm:$0xff]
    %v622 = vld [vmem:[%s2 + $0x1a0] sm:$0xff]
    %v623 = vld [vmem:[%s2 + $0x1a8] sm:$0xff]
    %v624 = vld [vmem:[%s2 + $0x1b0] sm:$0xff]
    %v625 = vld [vmem:[%s2 + $0x1b8] sm:$0xff]
    %627 = vset.pattern.permute.xlu0 32
    %628 = vperm.xlu0 %627, %v611
    %v629 = vpop.permute.xlu0 %628
    %632 = vset.pattern.permute.xlu0 32
    %633 = vperm.xlu0 %632, %v613
    %v634 = vpop.permute.xlu0 %633
    %637 = vset.pattern.permute.xlu0 32
    %638 = vperm.xlu0 %637, %v615
    %v639 = vpop.permute.xlu0 %638
    %642 = vset.pattern.permute.xlu0 32
    %643 = vperm.xlu0 %642, %v617
    %v644 = vpop.permute.xlu0 %643
    %647 = vset.pattern.permute.xlu0 32
    %648 = vperm.xlu0 %647, %v619
    %v649 = vpop.permute.xlu0 %648
    %652 = vset.pattern.permute.xlu0 32
    %653 = vperm.xlu0 %652, %v621
    %v654 = vpop.permute.xlu0 %653
    %657 = vset.pattern.permute.xlu0 32
    %658 = vperm.xlu0 %657, %v623
    %v659 = vpop.permute.xlu0 %658
    %662 = vset.pattern.permute.xlu0 32
    %663 = vperm.xlu0 %662, %v625
    %v664 = vpop.permute.xlu0 %663
    %v666 = vsel %vm35, %v611, 0
    %v668 = vsel %vm35, %v613, 0
    %v670 = vsel %vm35, %v615, 0
    %v672 = vsel %vm35, %v617, 0
    %v674 = vsel %vm35, %v619, 0
    %v676 = vsel %vm35, %v621, 0
    %v678 = vsel %vm35, %v623, 0
    %v680 = vsel %vm35, %v625, 0
    %682 = vmatpush.msra.mxu0 %v593
    %683 = vmatpush.msra.mxu0 %v591
    %684 = vmatpush.msra.mxu0 %v589
    %685 = vmatpush.msra.mxu0 %v587
    %686 = vmatpush.msra.mxu0 %v553
    %687 = vmatpush.msra.mxu0 %v552
    %688 = vmatpush.msra.mxu0 %v551
    %689 = vmatpush.msra.mxu0 %v550
    %690 = vmatpush.msra.mxu0 %v581
    %691 = vmatpush.msra.mxu0 %v579
    %692 = vmatpush.msra.mxu0 %v577
    %693 = vmatpush.msra.mxu0 %v575
    %694 = vmatpush.msra.mxu0 %v569
    %695 = vmatpush.msra.mxu0 %v567
    %696 = vmatpush.msra.mxu0 %v565
    %697 = vmatpush.msra.mxu0 %v563
    %698 = vmatmul.f32.gmra.mxu0 %v610
    %v699 = vpop.f32.mrf.mxu0
    %v700 = vadd.f32 %v629, %v699
    %701 = vmatmul.f32.gmra.mxu0 %v612
    %v702 = vpop.f32.mrf.mxu0
    %v703 = vadd.f32 %v634, %v702
    %704 = vmatmul.f32.gmra.mxu0 %v614
    %v705 = vpop.f32.mrf.mxu0
    %v706 = vadd.f32 %v639, %v705
    %707 = vmatmul.f32.gmra.mxu0 %v616
    %v708 = vpop.f32.mrf.mxu0
    %v709 = vadd.f32 %v644, %v708
    %710 = vmatmul.f32.gmra.mxu0 %v618
    %v711 = vpop.f32.mrf.mxu0
    %v712 = vadd.f32 %v649, %v711
    %713 = vmatmul.f32.gmra.mxu0 %v620
    %v714 = vpop.f32.mrf.mxu0
    %v715 = vadd.f32 %v654, %v714
    %716 = vmatmul.f32.gmra.mxu0 %v622
    %v717 = vpop.f32.mrf.mxu0
    %v718 = vadd.f32 %v659, %v717
    %719 = vmatmul.f32.gmra.mxu0 %v624
    %v720 = vpop.f32.mrf.mxu0
    %v721 = vadd.f32 %v664, %v720
    %722 = vdwg.mxu0
    %723 = vmatpush.msra.mxu0 0.0
    %724 = vmatpush.msra.mxu0 0.0
    %725 = vmatpush.msra.mxu0 0.0
    %726 = vmatpush.msra.mxu0 0.0
    %727 = vmatpush.msra.mxu0 0.0
    %728 = vmatpush.msra.mxu0 0.0
    %729 = vmatpush.msra.mxu0 0.0
    %730 = vmatpush.msra.mxu0 0.0
    %731 = vmatpush.msra.mxu0 0.0
    %732 = vmatpush.msra.mxu0 0.0
    %733 = vmatpush.msra.mxu0 0.0
    %734 = vmatpush.msra.mxu0 0.0
    %735 = vmatpush.msra.mxu0 %v605
    %736 = vmatpush.msra.mxu0 %v603
    %737 = vmatpush.msra.mxu0 %v601
    %738 = vmatpush.msra.mxu0 %v599
    %739 = vmatmul.f32.gmra.mxu0 %v666
    %v740 = vpop.f32.mrf.mxu0
    %v741 = vadd.f32 %v700, %v740
    %742 = vmatmul.f32.gmra.mxu0 %v668
    %v743 = vpop.f32.mrf.mxu0
    %v744 = vadd.f32 %v703, %v743
    %745 = vmatmul.f32.gmra.mxu0 %v670
    %v746 = vpop.f32.mrf.mxu0
    %v747 = vadd.f32 %v706, %v746
    %748 = vmatmul.f32.gmra.mxu0 %v672
    %v749 = vpop.f32.mrf.mxu0
    %v750 = vadd.f32 %v709, %v749
    %751 = vmatmul.f32.gmra.mxu0 %v674
    %v752 = vpop.f32.mrf.mxu0
    %v753 = vadd.f32 %v712, %v752
    %754 = vmatmul.f32.gmra.mxu0 %v676
    %v755 = vpop.f32.mrf.mxu0
    %v756 = vadd.f32 %v715, %v755
    %757 = vmatmul.f32.gmra.mxu0 %v678
    %v758 = vpop.f32.mrf.mxu0
    %v759 = vadd.f32 %v718, %v758
    %760 = vmatmul.f32.gmra.mxu0 %v680
    %v761 = vpop.f32.mrf.mxu0
    %v762 = vadd.f32 %v721, %v761
    %763 = vdwg.mxu0
    %v764 = vtanh.pop %v741
    %v765 = vtanh.pop %v744
    %v766 = vtanh.pop %v747
    %v767 = vtanh.pop %v750
    %v768 = vxor.u32 %v753, 2147483648
    %v769 = vxor.u32 %v756, 2147483648
    %v770 = vxor.u32 %v759, 2147483648
    %v771 = vxor.u32 %v762, 2147483648
    %v772 = vmul.f32 %v768, 1.442695
    %v773 = vpow.pop %v772
    %v774 = vmul.f32 %v769, 1.442695
    %v775 = vpow.pop %v774
    %v776 = vmul.f32 %v770, 1.442695
    %v777 = vpow.pop %v776
    %v778 = vmul.f32 %v771, 1.442695
    %v779 = vpow.pop %v778
    %v780 = vadd.f32 %v773, 1.0
    %v781 = vadd.f32 %v775, 1.0
    %v782 = vadd.f32 %v777, 1.0
    %v783 = vadd.f32 %v779, 1.0
    %v784 = vrcp.pop %v780
    %v785 = vmul.f32 %v780, %v784
    %v786 = vsub.f32 1.0, %v785
    %v787 = vmul.f32 %v784, %v786
    %v788 = vadd.f32 %v784, %v787
    %vm789 = vweird.f32 %v780
    %vm790 = vweird.f32 %v784
    %vm791 = vmor %vm789, %vm790
    %v792 = vsel %vm791, %v784, %v788
    %v793 = vand.u32 2147483647, %v780
    %vm794 = vcmp.eq.f32.partialorder %v793, 8.507059e+37
    %v795 = vand.u32 %v780, 2147483648
    %v796 = vor.u32 1.1754944e-38, %v795
    %v797 = vsel %vm794, %v796, %v792
    %v798 = vmul.f32 1.0, %v797
    %v799 = vrcp.pop %v781
    %v800 = vmul.f32 %v781, %v799
    %v801 = vsub.f32 1.0, %v800
    %v802 = vmul.f32 %v799, %v801
    %v803 = vadd.f32 %v799, %v802
    %vm804 = vweird.f32 %v781
    %vm805 = vweird.f32 %v799
    %vm806 = vmor %vm804, %vm805
    %v807 = vsel %vm806, %v799, %v803
    %v808 = vand.u32 2147483647, %v781
    %vm809 = vcmp.eq.f32.partialorder %v808, 8.507059e+37
    %v810 = vand.u32 %v781, 2147483648
    %v811 = vor.u32 1.1754944e-38, %v810
    %v812 = vsel %vm809, %v811, %v807
    %v813 = vmul.f32 1.0, %v812
    %v814 = vrcp.pop %v782
    %v815 = vmul.f32 %v782, %v814
    %v816 = vsub.f32 1.0, %v815
    %v817 = vmul.f32 %v814, %v816
    %v818 = vadd.f32 %v814, %v817
    %vm819 = vweird.f32 %v782
    %vm820 = vweird.f32 %v814
    %vm821 = vmor %vm819, %vm820
    %v822 = vsel %vm821, %v814, %v818
    %v823 = vand.u32 2147483647, %v782
    %vm824 = vcmp.eq.f32.partialorder %v823, 8.507059e+37
    %v825 = vand.u32 %v782, 2147483648
    %v826 = vor.u32 1.1754944e-38, %v825
    %v827 = vsel %vm824, %v826, %v822
    %v828 = vmul.f32 1.0, %v827
    %v829 = vrcp.pop %v783
    %v830 = vmul.f32 %v783, %v829
    %v831 = vsub.f32 1.0, %v830
    %v832 = vmul.f32 %v829, %v831
    %v833 = vadd.f32 %v829, %v832
    %vm834 = vweird.f32 %v783
    %vm835 = vweird.f32 %v829
    %vm836 = vmor %vm834, %vm835
    %v837 = vsel %vm836, %v829, %v833
    %v838 = vand.u32 2147483647, %v783
    %vm839 = vcmp.eq.f32.partialorder %v838, 8.507059e+37
    %v840 = vand.u32 %v783, 2147483648
    %v841 = vor.u32 1.1754944e-38, %v840
    %v842 = vsel %vm839, %v841, %v837
    %v843 = vmul.f32 1.0, %v842
    %v844 = vmul.f32 %v764, %v798
    %v845 = vmul.f32 %v765, %v813
    %v846 = vmul.f32 %v766, %v828
    %v847 = vmul.f32 %v767, %v843
    %v848 = vld [vmem:[%s2 + $0x1c0] sm:$0xff]
    %v849 = vld [vmem:[%s2 + $0x1d0] sm:$0xff]
    %v850 = vld [vmem:[%s2 + $0x1e0] sm:$0xff]
    %v851 = vld [vmem:[%s2 + $0x1f0] sm:$0xff]
    %v852 = vld [vmem:[%s2 + $0x200] sm:$0xff]
    %v853 = vld [vmem:[%s2 + $0x210] sm:$0xff]
    %v854 = vld [vmem:[%s2 + $0x220] sm:$0xff]
    %v855 = vld [vmem:[%s2 + $0x230] sm:$0xff]
    %v856 = vld [vmem:[%s2 + $0x1c8] sm:$0xff]
    %v857 = vld [vmem:[%s2 + $0x1d8] sm:$0xff]
    %v858 = vld [vmem:[%s2 + $0x1e8] sm:$0xff]
    %v859 = vld [vmem:[%s2 + $0x1f8] sm:$0xff]
    %v860 = vld [vmem:[%s2 + $0x208] sm:$0xff]
    %v861 = vld [vmem:[%s2 + $0x218] sm:$0xff]
    %v862 = vld [vmem:[%s2 + $0x228] sm:$0xff]
    %v863 = vld [vmem:[%s2 + $0x238] sm:$0xff]
    %865 = vset.pattern.permute.xlu0 32
    %866 = vperm.xlu0 %865, %v856
    %v867 = vpop.permute.xlu0 %866
    %870 = vset.pattern.permute.xlu0 32
    %871 = vperm.xlu0 %870, %v857
    %v872 = vpop.permute.xlu0 %871
    %875 = vset.pattern.permute.xlu0 32
    %876 = vperm.xlu0 %875, %v858
    %v877 = vpop.permute.xlu0 %876
    %880 = vset.pattern.permute.xlu0 32
    %881 = vperm.xlu0 %880, %v859
    %v882 = vpop.permute.xlu0 %881
    %885 = vset.pattern.permute.xlu0 32
    %886 = vperm.xlu0 %885, %v860
    %v887 = vpop.permute.xlu0 %886
    %890 = vset.pattern.permute.xlu0 32
    %891 = vperm.xlu0 %890, %v861
    %v892 = vpop.permute.xlu0 %891
    %895 = vset.pattern.permute.xlu0 32
    %896 = vperm.xlu0 %895, %v862
    %v897 = vpop.permute.xlu0 %896
    %900 = vset.pattern.permute.xlu0 32
    %901 = vperm.xlu0 %900, %v863
    %v902 = vpop.permute.xlu0 %901
    %v905 = vsel %vm35, %v848, 0
    %v908 = vsel %vm35, %v849, 0
    %v911 = vsel %vm35, %v850, 0
    %v914 = vsel %vm35, %v851, 0
    %v917 = vsel %vm35, %v852, 0
    %v920 = vsel %vm35, %v853, 0
    %v923 = vsel %vm35, %v854, 0
    %v926 = vsel %vm35, %v855, 0
    %928 = vmatpush.msra.mxu0 0.0
    %929 = vmatpush.msra.mxu0 0.0
    %930 = vmatpush.msra.mxu0 0.0
    %931 = vmatpush.msra.mxu0 0.0
    %932 = vmatpush.msra.mxu0 0.0
    %933 = vmatpush.msra.mxu0 0.0
    %934 = vmatpush.msra.mxu0 0.0
    %935 = vmatpush.msra.mxu0 0.0
    %936 = vmatpush.msra.mxu0 0.0
    %937 = vmatpush.msra.mxu0 0.0
    %938 = vmatpush.msra.mxu0 0.0
    %939 = vmatpush.msra.mxu0 0.0
    %940 = vmatpush.msra.mxu0 %v847
    %941 = vmatpush.msra.mxu0 %v846
    %942 = vmatpush.msra.mxu0 %v845
    %943 = vmatpush.msra.mxu0 %v844
    %944 = vmatmul.f32.gmra.mxu0 %v905
    %v945 = vpop.f32.mrf.mxu0
    %v946 = vadd.f32 %v867, %v945
    %947 = vmatmul.f32.gmra.mxu0 %v908
    %v948 = vpop.f32.mrf.mxu0
    %v949 = vadd.f32 %v872, %v948
    %950 = vmatmul.f32.gmra.mxu0 %v911
    %v951 = vpop.f32.mrf.mxu0
    %v952 = vadd.f32 %v877, %v951
    %953 = vmatmul.f32.gmra.mxu0 %v914
    %v954 = vpop.f32.mrf.mxu0
    %v955 = vadd.f32 %v882, %v954
    %956 = vmatmul.f32.gmra.mxu0 %v917
    %v957 = vpop.f32.mrf.mxu0
    %v958 = vadd.f32 %v887, %v957
    %959 = vmatmul.f32.gmra.mxu0 %v920
    %v960 = vpop.f32.mrf.mxu0
    %v961 = vadd.f32 %v892, %v960
    %962 = vmatmul.f32.gmra.mxu0 %v923
    %v963 = vpop.f32.mrf.mxu0
    %v964 = vadd.f32 %v897, %v963
    %965 = vmatmul.f32.gmra.mxu0 %v926
    %v966 = vpop.f32.mrf.mxu0
    %v967 = vadd.f32 %v902, %v966
    %968 = vdwg.mxu0
    %v969 = vadd.f32 %v550, %v946
    %v970 = vadd.f32 %v551, %v949
    %v971 = vadd.f32 %v552, %v952
    %v972 = vadd.f32 %v553, %v955
    %v973 = vmul.f32 %v969, %v56
    %v974 = vmul.f32 %v970, %v56
    %v975 = vmul.f32 %v971, %v56
    %v976 = vmul.f32 %v972, %v56
    %v977 = vadd.f32 %v554, %v958
    %v978 = vadd.f32 %v555, %v961
    %v979 = vadd.f32 %v556, %v964
    %v980 = vadd.f32 %v557, %v967
    %985 = vrot.lane.b32.xlu0 %v973, 8
    %v986 = vpop.permute.xlu0 %985
    %987 = vrot.lane.b32.xlu0 %v974, 8
    %v988 = vpop.permute.xlu0 %987
    %989 = vrot.lane.b32.xlu0 %v975, 8
    %v990 = vpop.permute.xlu0 %989
    %991 = vrot.lane.b32.xlu0 %v976, 8
    %v992 = vpop.permute.xlu0 %991
    %997 = vrot.lane.b32.xlu0 %v973, 4
    %v998 = vpop.permute.xlu0 %997
    %999 = vrot.lane.b32.xlu0 %v974, 4
    %v1000 = vpop.permute.xlu0 %999
    %1001 = vrot.lane.b32.xlu0 %v975, 4
    %v1002 = vpop.permute.xlu0 %1001
    %1003 = vrot.lane.b32.xlu0 %v976, 4
    %v1004 = vpop.permute.xlu0 %1003
    %1009 = vrot.lane.b32.xlu0 %v973, 124
    %v1010 = vpop.permute.xlu0 %1009
    %1011 = vrot.lane.b32.xlu0 %v974, 124
    %v1012 = vpop.permute.xlu0 %1011
    %1013 = vrot.lane.b32.xlu0 %v975, 124
    %v1014 = vpop.permute.xlu0 %1013
    %1015 = vrot.lane.b32.xlu0 %v976, 124
    %v1016 = vpop.permute.xlu0 %1015
    %1021 = vrot.lane.b32.xlu0 %v973, 120
    %v1022 = vpop.permute.xlu0 %1021
    %1023 = vrot.lane.b32.xlu0 %v974, 120
    %v1024 = vpop.permute.xlu0 %1023
    %1025 = vrot.lane.b32.xlu0 %v975, 120
    %v1026 = vpop.permute.xlu0 %1025
    %1027 = vrot.lane.b32.xlu0 %v976, 120
    %v1028 = vpop.permute.xlu0 %1027
    %v1033 = vld [vmem:[%s2 + $0x240] sm:$0xff]
    %v1034 = vld [vmem:[%s2 + $0x248] sm:$0xff]
    %v1035 = vld [vmem:[%s2 + $0x250] sm:$0xff]
    %v1036 = vld [vmem:[%s2 + $0x258] sm:$0xff]
    %v1037 = vld [vmem:[%s2 + $0x260] sm:$0xff]
    %v1038 = vld [vmem:[%s2 + $0x268] sm:$0xff]
    %v1039 = vld [vmem:[%s2 + $0x270] sm:$0xff]
    %v1040 = vld [vmem:[%s2 + $0x278] sm:$0xff]
    %v1041 = vld [vmem:[%s2 + $0x280] sm:$0xff]
    %v1042 = vld [vmem:[%s2 + $0x288] sm:$0xff]
    %v1043 = vld [vmem:[%s2 + $0x290] sm:$0xff]
    %v1044 = vld [vmem:[%s2 + $0x298] sm:$0xff]
    %v1045 = vld [vmem:[%s2 + $0x2a0] sm:$0xff]
    %v1046 = vld [vmem:[%s2 + $0x2a8] sm:$0xff]
    %v1047 = vld [vmem:[%s2 + $0x2b0] sm:$0xff]
    %v1048 = vld [vmem:[%s2 + $0x2b8] sm:$0xff]
    %1050 = vset.pattern.permute.xlu0 32
    %1051 = vperm.xlu0 %1050, %v1034
    %v1052 = vpop.permute.xlu0 %1051
    %1055 = vset.pattern.permute.xlu0 32
    %1056 = vperm.xlu0 %1055, %v1036
    %v1057 = vpop.permute.xlu0 %1056
    %1060 = vset.pattern.permute.xlu0 32
    %1061 = vperm.xlu0 %1060, %v1038
    %v1062 = vpop.permute.xlu0 %1061
    %1065 = vset.pattern.permute.xlu0 32
    %1066 = vperm.xlu0 %1065, %v1040
    %v1067 = vpop.permute.xlu0 %1066
    %1070 = vset.pattern.permute.xlu0 32
    %1071 = vperm.xlu0 %1070, %v1042
    %v1072 = vpop.permute.xlu0 %1071
    %1075 = vset.pattern.permute.xlu0 32
    %1076 = vperm.xlu0 %1075, %v1044
    %v1077 = vpop.permute.xlu0 %1076
    %1080 = vset.pattern.permute.xlu0 32
    %1081 = vperm.xlu0 %1080, %v1046
    %v1082 = vpop.permute.xlu0 %1081
    %1085 = vset.pattern.permute.xlu0 32
    %1086 = vperm.xlu0 %1085, %v1048
    %v1087 = vpop.permute.xlu0 %1086
    %v1089 = vsel %vm35, %v1034, 0
    %v1091 = vsel %vm35, %v1036, 0
    %v1093 = vsel %vm35, %v1038, 0
    %v1095 = vsel %vm35, %v1040, 0
    %v1097 = vsel %vm35, %v1042, 0
    %v1099 = vsel %vm35, %v1044, 0
    %v1101 = vsel %vm35, %v1046, 0
    %v1103 = vsel %vm35, %v1048, 0
    %1105 = vmatpush.msra.mxu0 %v1016
    %1106 = vmatpush.msra.mxu0 %v1014
    %1107 = vmatpush.msra.mxu0 %v1012
    %1108 = vmatpush.msra.mxu0 %v1010
    %1109 = vmatpush.msra.mxu0 %v976
    %1110 = vmatpush.msra.mxu0 %v975
    %1111 = vmatpush.msra.mxu0 %v974
    %1112 = vmatpush.msra.mxu0 %v973
    %1113 = vmatpush.msra.mxu0 %v1004
    %1114 = vmatpush.msra.mxu0 %v1002
    %1115 = vmatpush.msra.mxu0 %v1000
    %1116 = vmatpush.msra.mxu0 %v998
    %1117 = vmatpush.msra.mxu0 %v992
    %1118 = vmatpush.msra.mxu0 %v990
    %1119 = vmatpush.msra.mxu0 %v988
    %1120 = vmatpush.msra.mxu0 %v986
    %1121 = vmatmul.f32.gmra.mxu0 %v1033
    %v1122 = vpop.f32.mrf.mxu0
    %v1123 = vadd.f32 %v1052, %v1122
    %1124 = vmatmul.f32.gmra.mxu0 %v1035
    %v1125 = vpop.f32.mrf.mxu0
    %v1126 = vadd.f32 %v1057, %v1125
    %1127 = vmatmul.f32.gmra.mxu0 %v1037
    %v1128 = vpop.f32.mrf.mxu0
    %v1129 = vadd.f32 %v1062, %v1128
    %1130 = vmatmul.f32.gmra.mxu0 %v1039
    %v1131 = vpop.f32.mrf.mxu0
    %v1132 = vadd.f32 %v1067, %v1131
    %1133 = vmatmul.f32.gmra.mxu0 %v1041
    %v1134 = vpop.f32.mrf.mxu0
    %v1135 = vadd.f32 %v1072, %v1134
    %1136 = vmatmul.f32.gmra.mxu0 %v1043
    %v1137 = vpop.f32.mrf.mxu0
    %v1138 = vadd.f32 %v1077, %v1137
    %1139 = vmatmul.f32.gmra.mxu0 %v1045
    %v1140 = vpop.f32.mrf.mxu0
    %v1141 = vadd.f32 %v1082, %v1140
    %1142 = vmatmul.f32.gmra.mxu0 %v1047
    %v1143 = vpop.f32.mrf.mxu0
    %v1144 = vadd.f32 %v1087, %v1143
    %1145 = vdwg.mxu0
    %1146 = vmatpush.msra.mxu0 0.0
    %1147 = vmatpush.msra.mxu0 0.0
    %1148 = vmatpush.msra.mxu0 0.0
    %1149 = vmatpush.msra.mxu0 0.0
    %1150 = vmatpush.msra.mxu0 0.0
    %1151 = vmatpush.msra.mxu0 0.0
    %1152 = vmatpush.msra.mxu0 0.0
    %1153 = vmatpush.msra.mxu0 0.0
    %1154 = vmatpush.msra.mxu0 0.0
    %1155 = vmatpush.msra.mxu0 0.0
    %1156 = vmatpush.msra.mxu0 0.0
    %1157 = vmatpush.msra.mxu0 0.0
    %1158 = vmatpush.msra.mxu0 %v1028
    %1159 = vmatpush.msra.mxu0 %v1026
    %1160 = vmatpush.msra.mxu0 %v1024
    %1161 = vmatpush.msra.mxu0 %v1022
    %1162 = vmatmul.f32.gmra.mxu0 %v1089
    %v1163 = vpop.f32.mrf.mxu0
    %v1164 = vadd.f32 %v1123, %v1163
    %1165 = vmatmul.f32.gmra.mxu0 %v1091
    %v1166 = vpop.f32.mrf.mxu0
    %v1167 = vadd.f32 %v1126, %v1166
    %1168 = vmatmul.f32.gmra.mxu0 %v1093
    %v1169 = vpop.f32.mrf.mxu0
    %v1170 = vadd.f32 %v1129, %v1169
    %1171 = vmatmul.f32.gmra.mxu0 %v1095
    %v1172 = vpop.f32.mrf.mxu0
    %v1173 = vadd.f32 %v1132, %v1172
    %1174 = vmatmul.f32.gmra.mxu0 %v1097
    %v1175 = vpop.f32.mrf.mxu0
    %v1176 = vadd.f32 %v1135, %v1175
    %1177 = vmatmul.f32.gmra.mxu0 %v1099
    %v1178 = vpop.f32.mrf.mxu0
    %v1179 = vadd.f32 %v1138, %v1178
    %1180 = vmatmul.f32.gmra.mxu0 %v1101
    %v1181 = vpop.f32.mrf.mxu0
    %v1182 = vadd.f32 %v1141, %v1181
    %1183 = vmatmul.f32.gmra.mxu0 %v1103
    %v1184 = vpop.f32.mrf.mxu0
    %v1185 = vadd.f32 %v1144, %v1184
    %1186 = vdwg.mxu0
    %v1187 = vtanh.pop %v1164
    %v1188 = vtanh.pop %v1167
    %v1189 = vtanh.pop %v1170
    %v1190 = vtanh.pop %v1173
    %v1191 = vxor.u32 %v1176, 2147483648
    %v1192 = vxor.u32 %v1179, 2147483648
    %v1193 = vxor.u32 %v1182, 2147483648
    %v1194 = vxor.u32 %v1185, 2147483648
    %v1195 = vmul.f32 %v1191, 1.442695
    %v1196 = vpow.pop %v1195
    %v1197 = vmul.f32 %v1192, 1.442695
    %v1198 = vpow.pop %v1197
    %v1199 = vmul.f32 %v1193, 1.442695
    %v1200 = vpow.pop %v1199
    %v1201 = vmul.f32 %v1194, 1.442695
    %v1202 = vpow.pop %v1201
    %v1203 = vadd.f32 %v1196, 1.0
    %v1204 = vadd.f32 %v1198, 1.0
    %v1205 = vadd.f32 %v1200, 1.0
    %v1206 = vadd.f32 %v1202, 1.0
    %v1207 = vrcp.pop %v1203
    %v1208 = vmul.f32 %v1203, %v1207
    %v1209 = vsub.f32 1.0, %v1208
    %v1210 = vmul.f32 %v1207, %v1209
    %v1211 = vadd.f32 %v1207, %v1210
    %vm1212 = vweird.f32 %v1203
    %vm1213 = vweird.f32 %v1207
    %vm1214 = vmor %vm1212, %vm1213
    %v1215 = vsel %vm1214, %v1207, %v1211
    %v1216 = vand.u32 2147483647, %v1203
    %vm1217 = vcmp.eq.f32.partialorder %v1216, 8.507059e+37
    %v1218 = vand.u32 %v1203, 2147483648
    %v1219 = vor.u32 1.1754944e-38, %v1218
    %v1220 = vsel %vm1217, %v1219, %v1215
    %v1221 = vmul.f32 1.0, %v1220
    %v1222 = vrcp.pop %v1204
    %v1223 = vmul.f32 %v1204, %v1222
    %v1224 = vsub.f32 1.0, %v1223
    %v1225 = vmul.f32 %v1222, %v1224
    %v1226 = vadd.f32 %v1222, %v1225
    %vm1227 = vweird.f32 %v1204
    %vm1228 = vweird.f32 %v1222
    %vm1229 = vmor %vm1227, %vm1228
    %v1230 = vsel %vm1229, %v1222, %v1226
    %v1231 = vand.u32 2147483647, %v1204
    %vm1232 = vcmp.eq.f32.partialorder %v1231, 8.507059e+37
    %v1233 = vand.u32 %v1204, 2147483648
    %v1234 = vor.u32 1.1754944e-38, %v1233
    %v1235 = vsel %vm1232, %v1234, %v1230
    %v1236 = vmul.f32 1.0, %v1235
    %v1237 = vrcp.pop %v1205
    %v1238 = vmul.f32 %v1205, %v1237
    %v1239 = vsub.f32 1.0, %v1238
    %v1240 = vmul.f32 %v1237, %v1239
    %v1241 = vadd.f32 %v1237, %v1240
    %vm1242 = vweird.f32 %v1205
    %vm1243 = vweird.f32 %v1237
    %vm1244 = vmor %vm1242, %vm1243
    %v1245 = vsel %vm1244, %v1237, %v1241
    %v1246 = vand.u32 2147483647, %v1205
    %vm1247 = vcmp.eq.f32.partialorder %v1246, 8.507059e+37
    %v1248 = vand.u32 %v1205, 2147483648
    %v1249 = vor.u32 1.1754944e-38, %v1248
    %v1250 = vsel %vm1247, %v1249, %v1245
    %v1251 = vmul.f32 1.0, %v1250
    %v1252 = vrcp.pop %v1206
    %v1253 = vmul.f32 %v1206, %v1252
    %v1254 = vsub.f32 1.0, %v1253
    %v1255 = vmul.f32 %v1252, %v1254
    %v1256 = vadd.f32 %v1252, %v1255
    %vm1257 = vweird.f32 %v1206
    %vm1258 = vweird.f32 %v1252
    %vm1259 = vmor %vm1257, %vm1258
    %v1260 = vsel %vm1259, %v1252, %v1256
    %v1261 = vand.u32 2147483647, %v1206
    %vm1262 = vcmp.eq.f32.partialorder %v1261, 8.507059e+37
    %v1263 = vand.u32 %v1206, 2147483648
    %v1264 = vor.u32 1.1754944e-38, %v1263
    %v1265 = vsel %vm1262, %v1264, %v1260
    %v1266 = vmul.f32 1.0, %v1265
    %v1267 = vmul.f32 %v1187, %v1221
    %v1268 = vmul.f32 %v1188, %v1236
    %v1269 = vmul.f32 %v1189, %v1251
    %v1270 = vmul.f32 %v1190, %v1266
    %v1271 = vld [vmem:[%s2 + $0x2c0] sm:$0xff]
    %v1272 = vld [vmem:[%s2 + $0x2d0] sm:$0xff]
    %v1273 = vld [vmem:[%s2 + $0x2e0] sm:$0xff]
    %v1274 = vld [vmem:[%s2 + $0x2f0] sm:$0xff]
    %v1275 = vld [vmem:[%s2 + $0x2c8] sm:$0xff]
    %v1276 = vld [vmem:[%s2 + $0x2d8] sm:$0xff]
    %v1277 = vld [vmem:[%s2 + $0x2e8] sm:$0xff]
    %v1278 = vld [vmem:[%s2 + $0x2f8] sm:$0xff]
    %v1280 = vsel %vm35, %v1271, 0
    %v1283 = vsel %vm35, %v1272, 0
    %v1286 = vsel %vm35, %v1273, 0
    %v1289 = vsel %vm35, %v1274, 0
    %1291 = vmatpush.msra.mxu0 0.0
    %1292 = vmatpush.msra.mxu0 0.0
    %1293 = vmatpush.msra.mxu0 0.0
    %1294 = vmatpush.msra.mxu0 0.0
    %1295 = vmatpush.msra.mxu0 0.0
    %1296 = vmatpush.msra.mxu0 0.0
    %1297 = vmatpush.msra.mxu0 0.0
    %1298 = vmatpush.msra.mxu0 0.0
    %1299 = vmatpush.msra.mxu0 0.0
    %1300 = vmatpush.msra.mxu0 0.0
    %1301 = vmatpush.msra.mxu0 0.0
    %1302 = vmatpush.msra.mxu0 0.0
    %1303 = vmatpush.msra.mxu0 %v1270
    %1304 = vmatpush.msra.mxu0 %v1269
    %1305 = vmatpush.msra.mxu0 %v1268
    %1306 = vmatpush.msra.mxu0 %v1267
    %1307 = vmatmul.f32.gmra.mxu0 %v1280
    %v1308 = vpop.f32.mrf.mxu0
    %v1309 = vadd.f32 0.0, %v1308
    %1310 = vmatmul.f32.gmra.mxu0 %v1283
    %v1311 = vpop.f32.mrf.mxu0
    %v1312 = vadd.f32 0.0, %v1311
    %1313 = vmatmul.f32.gmra.mxu0 %v1286
    %v1314 = vpop.f32.mrf.mxu0
    %v1315 = vadd.f32 0.0, %v1314
    %1316 = vmatmul.f32.gmra.mxu0 %v1289
    %v1317 = vpop.f32.mrf.mxu0
    %v1318 = vadd.f32 0.0, %v1317
    %1319 = vdwg.mxu0
    %v1320 = vadd.f32 %v977, %v1309
    %v1321 = vadd.f32 %v978, %v1312
    %v1322 = vadd.f32 %v979, %v1315
    %v1323 = vadd.f32 %v980, %v1318
    %1325 = vset.pattern.permute.xlu0 32
    %1326 = vperm.xlu0 %1325, %v1275
    %v1327 = vpop.permute.xlu0 %1326
    %1330 = vset.pattern.permute.xlu0 32
    %1331 = vperm.xlu0 %1330, %v1276
    %v1332 = vpop.permute.xlu0 %1331
    %1335 = vset.pattern.permute.xlu0 32
    %1336 = vperm.xlu0 %1335, %v1277
    %v1337 = vpop.permute.xlu0 %1336
    %1340 = vset.pattern.permute.xlu0 32
    %1341 = vperm.xlu0 %1340, %v1278
    %v1342 = vpop.permute.xlu0 %1341
    %v1344 = vadd.f32 %v1320, %v1327
    %v1345 = vadd.f32 %v1321, %v1332
    %v1346 = vadd.f32 %v1322, %v1337
    %v1347 = vadd.f32 %v1323, %v1342
    %v1348 = vmul.f32 %v1344, %v56
    %v1349 = vmul.f32 %v1345, %v56
    %v1350 = vmul.f32 %v1346, %v56
    %v1351 = vmul.f32 %v1347, %v56
    %v1352 = vld [vmem:[%s2 + $0x340] sm:$0xf]
    %v1353 = vld [vmem:[%s2 + $0x348] sm:$0xf]
    %1355 = vset.pattern.permute.xlu0 32
    %1356 = vperm.xlu0 %1355, %v1353
    %v1357 = vpop.permute.xlu0 %1356
    %v1360 = vsel %vm35, %v1352, 0
    %1362 = vmatpush.msra.mxu0 0.0
    %1363 = vmatpush.msra.mxu0 0.0
    %1364 = vmatpush.msra.mxu0 0.0
    %1365 = vmatpush.msra.mxu0 0.0
    %1366 = vmatpush.msra.mxu0 0.0
    %1367 = vmatpush.msra.mxu0 0.0
    %1368 = vmatpush.msra.mxu0 0.0
    %1369 = vmatpush.msra.mxu0 0.0
    %1370 = vmatpush.msra.mxu0 0.0
    %1371 = vmatpush.msra.mxu0 0.0
    %1372 = vmatpush.msra.mxu0 0.0
    %1373 = vmatpush.msra.mxu0 0.0
    %1374 = vmatpush.msra.mxu0 %v1351
    %1375 = vmatpush.msra.mxu0 %v1350
    %1376 = vmatpush.msra.mxu0 %v1349
    %1377 = vmatpush.msra.mxu0 %v1348
    %1378 = vmatmul.f32.gmra.mxu0 %v1360
    %v1379 = vpop.f32.mrf.mxu0
    %v1380 = vadd.f32 %v1357, %v1379
    %1381 = vdwg.mxu0
    %v1382 = vmul.f32 %v1380, %v56
    %v1383 = vmul.f32 %v1382, 1.442695
    %v1384 = vpow.pop %v1383
    %v1385 = vmul.f32 %v40, %v1384
    %v1386 = vmul.f32 %v1385, %v56
    %v1388 = vrot.slane %v1386, 2
    %v1390 = vadd.f32 %v1382, %v1388
    %v1392 = vrot.slane %v1390, 6
    %v1394 = vsel %vm98, %v40, %v1392
    %1396 = vrot.lane.b32.xlu0 %v1394, 120
    %v1397 = vpop.permute.xlu0 %1396
    %vm1399 = vcmask 125952
    %1400 = vst.msk [vmem:[#allocation2] sm:$0xf] %vm1399, %v1397
    %1402 = vrot.lane.b32.xlu0 %v1382, 120
    %v1403 = vpop.permute.xlu0 %1402
    %vm1405 = vcmask 125954
    %v1406 = vsel %vm1405, %v1403, 0.0
    %1407 = vadd.xlane.f32.xlu0 %v1406
    %v1408 = vpop.xlane.xlu0 %1407
    %v1410 = vrot.slane %v1408, 2
    %v1412 = vsel %vm98, %v1410, 0.0
    %v1413 = vrot.slane %v1412, 4
    %v1414 = vadd.f32 %v1412, %v1413
    %v1415 = vrot.slane %v1414, 2
    %v1416 = vadd.f32 %v1414, %v1415
    %v1417 = vrot.slane %v1416, 1
    %v1418 = vadd.f32 %v1416, %v1417
    %1419 = vrot.lane.b32.xlu0 %v1394, 96
    %v1420 = vpop.permute.xlu0 %1419
    %s1422 = scalar_lea.vmem [#allocation2], 4
    %1423 = vst.msk [vmem:[%s1422] sm:$0xf] %vm1399, %v1420
    %1424 = vrot.lane.b32.xlu0 %v1382, 96
    %v1425 = vpop.permute.xlu0 %1424
    %v1427 = vsel %vm1405, %v1425, 0.0
    %1428 = vadd.xlane.f32.xlu0 %v1427
    %v1429 = vpop.xlane.xlu0 %1428
    %v1431 = vrot.slane %v1429, 2
    %v1433 = vsel %vm98, %v1431, 0.0
    %v1434 = vrot.slane %v1433, 4
    %v1435 = vadd.f32 %v1433, %v1434
    %v1436 = vrot.slane %v1435, 2
    %v1437 = vadd.f32 %v1435, %v1436
    %v1438 = vrot.slane %v1437, 1
    %v1439 = vadd.f32 %v1437, %v1438
    %vm1440 = vcmask 1040384
    %v1441 = vsel %vm1440, %v1418, %v1439
    %vm1442 = vcmask 1024
    %1443 = vst.msk [vmem:[%s4] sm:$0x3] %vm1442, %v1441
    // Predicated region
    $region14: #{tpu_custom_call.1} parent=1 // pred_check
      _
    $region15: #{tpu_custom_call.1} parent=1 // pred_check_branch
      %1445 = sbr.rel (0) target = $region17
    $region16: #{tpu_custom_call.1} parent=1 // pred_region
      %1447 = vsyncadd [#allocation3], 0
      %s1448 = sshll.u32 [#allocation2], 4
      %s1449 = int_to_ptr.vmem [resolvable:$true] %s1448
      %s1450 = sshll.u32 %s3, 4
      %s1451 = int_to_ptr.hbm [resolvable:$true] %s1450
      %1456 = dma.vmem_to_hbm [thread:$0]  %s1449, 128, %s1451, [#allocation3], 64, 64, 4
    $region17: #{tpu_custom_call.1} parent=1 // pred_fallthru
      _
    // Predicated region
    $region18: #{tpu_custom_call.1} parent=1 // pred_check
      _
    $region19: #{tpu_custom_call.1} parent=1 // pred_check_branch
      %1458 = sbr.rel (0) target = $region21
    $region20: #{tpu_custom_call.1} parent=1 // pred_region
      _
    $region21: #{tpu_custom_call.1} parent=1 // pred_fallthru
      _
    // Predicated region
    $region22: #{tpu_custom_call.1} parent=1 // pred_check
      _
    $region23: #{tpu_custom_call.1} parent=1 // pred_check_branch
      %1460 = sbr.rel (0) target = $region25
    $region24: #{tpu_custom_call.1} parent=1 // pred_region
      %1462 = dma.done [#allocation3], 128
    $region25: #{tpu_custom_call.1} parent=1 // pred_fallthru
      _
    // Predicated region
    $region26: #{tpu_custom_call.1} parent=1 // pred_check
      _
    $region27: #{tpu_custom_call.1} parent=1 // pred_check_branch
      %1464 = sbr.rel (0) target = $region29
    $region28: #{tpu_custom_call.1} parent=1 // pred_region
      _
    $region29: #{tpu_custom_call.1} parent=1 // pred_fallthru
      _
    %1465 = vsyncpa [#allocation3], 1

</llo_original>
